<compile_context>
chip_gen: v5e
topology: v5e:2x2
jax: 0.10.0
libtpu: 0.0.40
codegen_flags: <defaults>
</compile_context>

<pallas_src>
import functools

import jax
import jax.numpy as jnp
from jax.experimental import pallas as pl
from jax.experimental.pallas import tpu as pltpu


def _round_up(x, m):
    return ((x + m - 1) // m) * m


def _pick_chunk(total, target):
    """Largest multiple of 128 that is <= target and divides `total`;
    falls back to `total` (single chunk) if none exists."""
    if total <= target:
        return total
    best = None
    c = 128
    while c <= target:
        if total % c == 0:
            best = c
        c += 128
    return best if best is not None else total


def _vmem_limit_bytes():
    # Leave headroom under physical VMEM (64 MiB on v7x, 128 MiB on v5e/v6e).
    try:
        cap = pltpu.get_tpu_info().vmem_capacity_bytes
        return int(min(cap * 0.85, 100 * 2 ** 20))
    except Exception:
        return 56 * 2 ** 20


# ----------------------------------------------------------------------------
# Pallas kernels
# ----------------------------------------------------------------------------
def _router_kernel(x_ref, gate_ref, logits_ref):
    # logits = x @ gate_t   (gate pre-transposed to (H, E)); f32 output.
    logits_ref[...] = jnp.dot(x_ref[...], gate_ref[...],
                              preferred_element_type=jnp.float32)


def _grouped_mlp_kernel(grp_ref, vld_ref, x_ref, wg_ref, wu_ref, wd_ref,
                        *rest, debug):
    """Grid = (num_row_tiles, num_i_chunks).  Each row tile belongs to exactly
    one expert (grp_ref[i]); the weight BlockSpecs already selected that
    expert's weight chunk, so the body is a dense chunked MLP with an f32
    accumulator over the intermediate-dim chunks."""
    if debug:
        out_ref, fg_gate_ref, fg_up_ref, inter_ref, acc_ref = rest
    else:
        out_ref, acc_ref = rest
        fg_gate_ref = fg_up_ref = inter_ref = None

    i = pl.program_id(0)
    c = pl.program_id(1)
    nc = pl.num_programs(1)

    @pl.when(vld_ref[i] != 0)              # skip pure-padding tiles entirely
    def _():
        @pl.when(c == 0)
        def _():
            acc_ref[...] = jnp.zeros_like(acc_ref)

        x = x_ref[...]                      # (tm, H), stays resident across c
        # first GEMM, chunk c of the intermediate dim:
        g = jax.lax.dot_general(x, wg_ref[0],
                                (((1,), (0,)), ((), ())),
                                preferred_element_type=jnp.float32)   # (tm, ck)
        u = jax.lax.dot_general(x, wu_ref[0],
                                (((1,), (0,)), ((), ())),
                                preferred_element_type=jnp.float32)   # (tm, ck)
        inter = (g * jax.nn.sigmoid(g)) * u                           # silu*up

        # second GEMM, accumulated over chunks:
        acc_ref[...] += jax.lax.dot_general(
            inter.astype(x.dtype), wd_ref[0],
            (((1,), (0,)), ((), ())),
            preferred_element_type=jnp.float32)

        if debug:
            fg_gate_ref[...] = g.astype(fg_gate_ref.dtype)
            fg_up_ref[...] = u.astype(fg_up_ref.dtype)
            inter_ref[...] = inter.astype(inter_ref.dtype)

        @pl.when(c == nc - 1)
        def _():
            out_ref[...] = acc_ref[...].astype(out_ref.dtype)


def _combine_kernel(hsu_ref, w_ref, out_ref):
    # hsu_ref: (top_k, tc, H), w_ref: (top_k, tc, 1).  Reduce over the leading
    # axis: plain VPU multiply-adds on dense lane-wide tiles.
    acc = hsu_ref[0] * w_ref[0]
    for k in range(1, hsu_ref.shape[0]):
        acc = acc + hsu_ref[k] * w_ref[k]
    out_ref[...] = acc.astype(out_ref.dtype)


# ----------------------------------------------------------------------------
# Pallas wrappers
# ----------------------------------------------------------------------------
def router_logits_pallas(x_flat, gate_t, *, tq=512):
    T, H = x_flat.shape
    E = gate_t.shape[1]
    tq = max(8, min(_round_up(tq, 8), _round_up(T, 8)))
    Tpad = _round_up(T, tq)
    x_in = x_flat if Tpad == T else jnp.pad(x_flat, ((0, Tpad - T), (0, 0)))
    out = pl.pallas_call(
        _router_kernel,
        out_shape=jax.ShapeDtypeStruct((Tpad, E), jnp.float32),
        grid=(Tpad // tq,),
        in_specs=[pl.BlockSpec((tq, H), lambda i: (i, 0)),
                  pl.BlockSpec((H, E), lambda i: (0, 0))],   # gate resident
        out_specs=pl.BlockSpec((tq, E), lambda i: (i, 0)),
        compiler_params=pltpu.CompilerParams(
            dimension_semantics=("parallel",)),
    )(x_in, gate_t)
    return out[:T]


def grouped_moe_mlp(tile_group, tile_valid, x_padded, w_gate_t, w_up_t,
                    w_down_t, *, tm, ck, out_dtype, debug):
    Tp, H = x_padded.shape
    E, _, I = w_gate_t.shape
    num_tiles = Tp // tm
    num_chunks = I // ck

    kernel = functools.partial(_grouped_mlp_kernel, debug=debug)

    out_shapes = [jax.ShapeDtypeStruct((Tp, H), out_dtype)]
    out_specs = [pl.BlockSpec((tm, H), lambda i, c, grp, vld: (i, 0))]
    if debug:
        out_shapes += [jax.ShapeDtypeStruct((Tp, I), out_dtype),  # gate half
                       jax.ShapeDtypeStruct((Tp, I), out_dtype),  # up half
                       jax.ShapeDtypeStruct((Tp, I), out_dtype)]  # intermediate
        out_specs += [pl.BlockSpec((tm, ck), lambda i, c, grp, vld: (i, c)),
                      pl.BlockSpec((tm, ck), lambda i, c, grp, vld: (i, c)),
                      pl.BlockSpec((tm, ck), lambda i, c, grp, vld: (i, c))]

    return pl.pallas_call(
        kernel,
        out_shape=tuple(out_shapes),
        grid_spec=pltpu.PrefetchScalarGridSpec(
            num_scalar_prefetch=2,             # tile_group, tile_valid in SMEM
            grid=(num_tiles, num_chunks),
            in_specs=[
                pl.BlockSpec((tm, H), lambda i, c, grp, vld: (i, 0)),
                # data-dependent expert selection for the weight chunks
                pl.BlockSpec((1, H, ck), lambda i, c, grp, vld: (grp[i], 0, c)),
                pl.BlockSpec((1, H, ck), lambda i, c, grp, vld: (grp[i], 0, c)),
                pl.BlockSpec((1, ck, H), lambda i, c, grp, vld: (grp[i], c, 0)),
            ],
            out_specs=tuple(out_specs),
            scratch_shapes=[pltpu.VMEM((tm, H), jnp.float32)]),
        compiler_params=pltpu.CompilerParams(
            dimension_semantics=("parallel", "arbitrary"),
            vmem_limit_bytes=_vmem_limit_bytes()),
    )(tile_group, tile_valid, x_padded, w_gate_t, w_up_t, w_down_t)


def topk_combine(hsu_k, routing_weights, *, tc=512):
    """hsu_k: (top_k, T, H) un-permuted second-GEMM outputs; routing_weights:
    (T, top_k).  Returns (T, H)."""
    top_k, T, H = hsu_k.shape
    itemsize = jnp.dtype(hsu_k.dtype).itemsize
    # Cap the (top_k, tc, H) input block (double-buffered) to a modest budget.
    budget_rows = max(8, (8 * 2 ** 20) // max(1, top_k * H * itemsize))
    tc = min(tc, budget_rows)
    tc = max(8, (tc // 8) * 8)
    tc = min(tc, _round_up(T, 8))
    Tpad = _round_up(T, tc)

    w = jnp.transpose(routing_weights, (1, 0))[:, :, None]   # (top_k, T, 1)
    if Tpad != T:
        hsu_k = jnp.pad(hsu_k, ((0, 0), (0, Tpad - T), (0, 0)))
        w = jnp.pad(w, ((0, 0), (0, Tpad - T), (0, 0)))

    out = pl.pallas_call(
        _combine_kernel,
        out_shape=jax.ShapeDtypeStruct((Tpad, H), hsu_k.dtype),
        grid=(Tpad // tc,),
        in_specs=[pl.BlockSpec((top_k, tc, H), lambda i: (0, i, 0)),
                  pl.BlockSpec((top_k, tc, 1), lambda i: (0, i, 0))],
        out_specs=pl.BlockSpec((tc, H), lambda i: (i, 0)),
        compiler_params=pltpu.CompilerParams(
            dimension_semantics=("parallel",)),
    )(hsu_k, w)
    return out[:T]


# ----------------------------------------------------------------------------
# Full forward (mirrors Qwen3MoeGroupedGEMMBlock.forward)
# ----------------------------------------------------------------------------
def qwen3_moe_grouped_gemm_forward(hidden_states, gate, gate_up_proj,
                                   down_proj, *, top_k, num_experts,
                                   norm_topk_prob,
                                   row_tile=256,        # 128 on v5e
                                   i_chunk=512,
                                   router_tile=512, combine_tile=512,
                                   compute_dtype=None,  # jnp.bfloat16 in prod
                                   return_debug_tensors=False):
    B, S, H = hidden_states.shape
    T = B * S
    Tt = T * top_k
    E = num_experts
    I = down_proj.shape[-1]
    x_flat = hidden_states.reshape(T, H)
    param_dtype = x_flat.dtype
    cdt = jnp.dtype(param_dtype if compute_dtype is None else compute_dtype)

    tm = max(8, min(_round_up(row_tile, 8), _round_up(Tt, 8)))
    ck = _pick_chunk(I, i_chunk)

    # ---- one-time weight relayout (+ optional bf16 cast) ----
    gate_t = jnp.transpose(gate, (1, 0)).astype(cdt)                          # (H, E)
    w_gate_t = jnp.transpose(gate_up_proj[:, :I, :], (0, 2, 1)).astype(cdt)   # (E, H, I)
    w_up_t = jnp.transpose(gate_up_proj[:, I:, :], (0, 2, 1)).astype(cdt)     # (E, H, I)
    w_down_t = jnp.transpose(down_proj, (0, 2, 1)).astype(cdt)                # (E, I, H)
    x_cdt = x_flat.astype(cdt)

    # ---- router (Pallas GEMM, f32 logits; softmax/top-k in JAX glue) ----
    logits = router_logits_pallas(x_cdt, gate_t, tq=router_tile)
    routing = jax.nn.softmax(logits, axis=1)
    routing_weights, selected_experts = jax.lax.top_k(routing, top_k)
    if norm_topk_prob:
        routing_weights = routing_weights / routing_weights.sum(
            axis=-1, keepdims=True)
    routing_weights = routing_weights.astype(param_dtype)

    # ---- routing indices (glue) ----
    flat_experts = selected_experts.reshape(-1).astype(jnp.int32)
    token_counts_by_expert = jnp.bincount(flat_experts, length=E)
    gather_indices = jnp.argsort(flat_experts, stable=True).astype(jnp.int32)
    expert_ids_sorted = flat_experts[gather_indices]

    # ---- per-expert padded layout: every row tile owns exactly one expert ---
    counts = token_counts_by_expert.astype(jnp.int32)
    offsets = jnp.cumsum(counts) - counts
    padded_counts = ((counts + tm - 1) // tm) * tm
    padded_ends = jnp.cumsum(padded_counts)
    padded_offsets = padded_ends - padded_counts
    total_padded = padded_ends[-1]                       # runtime scalar

    Tp = _round_up(Tt + E * (tm - 1), tm)                # static upper bound
    num_tiles = Tp // tm

    row_idx = jnp.arange(Tt, dtype=jnp.int32)
    padded_pos = (padded_offsets[expert_ids_sorted]
                  + (row_idx - offsets[expert_ids_sorted]))

    # TODO(synk): fuse this permute (and the unpermute below) into the grouped
    # kernel via scalar-prefetched row indices + manual DMA gather/scatter.
    x_sorted = x_cdt[gather_indices // top_k]
    x_padded = jnp.zeros((Tp, H), cdt).at[padded_pos].set(x_sorted)

    tile_starts = jnp.arange(num_tiles, dtype=jnp.int32) * tm
    tile_group = jnp.searchsorted(padded_ends, tile_starts,
                                  side="right").astype(jnp.int32)
    tile_group = jnp.minimum(tile_group, E - 1)
    tile_valid = (tile_starts < total_padded).astype(jnp.int32)

    # ---- grouped GEMM expert MLP (Pallas hot path) ----
    outs = grouped_moe_mlp(tile_group, tile_valid, x_padded,
                           w_gate_t, w_up_t, w_down_t,
                           tm=tm, ck=ck, out_dtype=param_dtype,
                           debug=return_debug_tensors)
    second_padded = outs[0]
    second_gemm = second_padded[padded_pos]              # back to sorted order

    if return_debug_tensors:
        first_gemm = jnp.concatenate(
            [outs[1][padded_pos], outs[2][padded_pos]], axis=1)
        intermediate = outs[3][padded_pos]
    else:
        first_gemm = None
        intermediate = None

    # ---- unpermute directly into (top_k, T, H) (combine-friendly layout) ----
    tok = gather_indices // top_k
    slot = gather_indices % top_k
    hsu_k = jnp.zeros((top_k, T, H), second_gemm.dtype).at[slot, tok].set(
        second_gemm)
    if return_debug_tensors:
        hidden_states_unpermute = jnp.transpose(hsu_k, (1, 0, 2)).reshape(Tt, H)
    else:
        hidden_states_unpermute = None

    # ---- weighted top-k combine (Pallas) ----
    out_flat = topk_combine(hsu_k, routing_weights, tc=combine_tile)
    out = out_flat.reshape(B, S, H)

    result = {
        "token_counts_by_expert": token_counts_by_expert,
        "gather_indices": gather_indices,
        "topk_weights": routing_weights,
        "first_gemm": first_gemm,
        "intermediate": intermediate,
        "second_gemm": second_gemm,
        "hidden_states_unpermute": hidden_states_unpermute,
        "hidden_states": out,
    }
    return result, logits


# ----------------------------------------------------------------------------
# Plain-JAX reference (for correctness check)
# ----------------------------------------------------------------------------
def reference_forward(hidden_states, gate, gate_up_proj, down_proj, *,
                      top_k, num_experts, norm_topk_prob):
    B, S, H = hidden_states.shape
    T = B * S
    I = down_proj.shape[-1]
    x_flat = hidden_states.reshape(T, H)
    logits = (x_flat @ gate.T).astype(jnp.float32)
    routing = jax.nn.softmax(logits, axis=1)
    rw, sel = jax.lax.top_k(routing, top_k)
    if norm_topk_prob:
        rw = rw / rw.sum(axis=-1, keepdims=True)
    rw = rw.astype(x_flat.dtype)
    flat = sel.reshape(-1).astype(jnp.int32)
    gidx = jnp.argsort(flat, stable=True)
    eid = flat[gidx]
    x_perm = x_flat[gidx // top_k]
    w1_sel = gate_up_proj[eid]                       # (Tt, 2I, H)
    h1 = jnp.einsum("th,toh->to", x_perm, w1_sel)
    inter = jax.nn.silu(h1[:, :I]) * h1[:, I:]
    w2_sel = down_proj[eid]                          # (Tt, H, I)
    h2 = jnp.einsum("ti,thi->th", inter, w2_sel)
    unperm = jnp.zeros_like(h2).at[gidx].set(h2)
    out = (unperm.reshape(T, top_k, H) * rw[..., None]).sum(axis=1)
    return out.reshape(B, S, H), logits, h1, inter, h2, unperm


# ----------------------------------------------------------------------------
if __name__ == "__main__":
    # Small Qwen3-MoE-like config (real configs: row_tile=128-256, i_chunk=512)
    num_experts = 4
    top_k = 2
    hidden_size = 128
    moe_intermediate_size = 256      # exercises 2 intermediate chunks below
    norm_topk_prob = True
    B, S = 2, 8

    key = jax.random.PRNGKey(0)
    k_gate, k_gu, k_dn, k_x = jax.random.split(key, 4)
    gate = jax.random.normal(k_gate, (num_experts, hidden_size),
                             dtype=jnp.float32) * 0.02
    gate_up_proj = jax.random.normal(
        k_gu, (num_experts, 2 * moe_intermediate_size, hidden_size),
        dtype=jnp.float32) * 0.02
    down_proj = jax.random.normal(
        k_dn, (num_experts, hidden_size, moe_intermediate_size),
        dtype=jnp.float32) * 0.02
    hidden_states = jax.random.normal(
        k_x, (B, S, hidden_size), dtype=jnp.float32)

    # fp32 correctness run (debug tensors on so all intermediates are checked)
    fwd = jax.jit(functools.partial(
        qwen3_moe_grouped_gemm_forward,
        top_k=top_k, num_experts=num_experts, norm_topk_prob=norm_topk_prob,
        row_tile=8,          # tiny demo shapes; 128 (v5e) / 256 (v6e, v7x) prod
        i_chunk=128,         # exercises the chunked-I accumulator (2 chunks)
        return_debug_tensors=True))

    result, logits_out = fwd(hidden_states, gate, gate_up_proj, down_proj)
    jax.block_until_ready(result["hidden_states"])

    (ref_out, ref_logits, ref_h1, ref_inter, ref_h2,
     ref_unperm) = reference_forward(
        hidden_states, gate, gate_up_proj, down_proj,
        top_k=top_k, num_experts=num_experts, norm_topk_prob=norm_topk_prob)

    Tt = B * S * top_k
    assert result["hidden_states"].shape == (B, S, hidden_size)
    assert result["first_gemm"].shape == (Tt, 2 * moe_intermediate_size)
    assert result["intermediate"].shape == (Tt, moe_intermediate_size)
    assert result["second_gemm"].shape == (Tt, hidden_size)
    assert jnp.allclose(logits_out, ref_logits, atol=1e-4, rtol=1e-4)
    assert jnp.allclose(result["first_gemm"], ref_h1, atol=1e-4, rtol=1e-4)
    assert jnp.allclose(result["intermediate"], ref_inter, atol=1e-4, rtol=1e-4)
    assert jnp.allclose(result["second_gemm"], ref_h2, atol=1e-4, rtol=1e-4)
    assert jnp.allclose(result["hidden_states_unpermute"], ref_unperm,
                        atol=1e-4, rtol=1e-4)
    assert jnp.allclose(result["hidden_states"], ref_out, atol=1e-4, rtol=1e-4)

    # bf16 production-mode smoke test (lean path: no debug HBM writebacks,
    # bf16 MXU rate / half weight DMA, f32 accumulation).
    fwd_bf16 = jax.jit(functools.partial(
        qwen3_moe_grouped_gemm_forward,
        top_k=top_k, num_experts=num_experts, norm_topk_prob=norm_topk_prob,
        row_tile=16, i_chunk=128,
        compute_dtype=jnp.bfloat16, return_debug_tensors=False))
    result_bf16, logits_bf16 = fwd_bf16(hidden_states, gate, gate_up_proj,
                                        down_proj)
    jax.block_until_ready(result_bf16["hidden_states"])
    assert result_bf16["hidden_states"].shape == (B, S, hidden_size)
    assert bool(jnp.all(jnp.isfinite(result_bf16["hidden_states"])))
    assert logits_bf16.dtype == jnp.float32        # routing precision kept f32

    print("KERNEL_OK")
</pallas_src>

<mosaic_0001>
module attributes {stable_mosaic.version = 11 : i64} {
  func.func @_router_kernel(%arg0: i32, %arg1: memref<16x128xf32, #tpu.memory_space<vmem>>, %arg2: memref<128x4xf32, #tpu.memory_space<vmem>>, %arg3: memref<16x4xf32, #tpu.memory_space<vmem>>) attributes {dimension_semantics = [#tpu.dimension_semantics<parallel>], iteration_bounds = array<i64: 1>, scalar_prefetch = 0 : i64, scratch_operands = 0 : i64, tpu.core_type = #tpu.core_type<tc>, window_params = [{transform_indices = @transform_0, window_bounds = array<i64: 16, 128>}, {pipeline_mode = #tpu.pipeline_mode<synchronous>, transform_indices = @transform_1, window_bounds = array<i64: 128, 4>}, {transform_indices = @transform_2, window_bounds = array<i64: 16, 4>}]} {
    %c0 = arith.constant 0 : index
    %c0_0 = arith.constant 0 : index
    %0 = vector.load %arg1[%c0, %c0_0] : memref<16x128xf32, #tpu.memory_space<vmem>>, vector<16x128xf32>
    %c0_1 = arith.constant 0 : index
    %c0_2 = arith.constant 0 : index
    %1 = vector.load %arg2[%c0_1, %c0_2] : memref<128x4xf32, #tpu.memory_space<vmem>>, vector<128x4xf32>
    %cst = arith.constant dense<0.000000e+00> : vector<16x4xf32>
    %2 = tpu.matmul %0, %1, %cst {dimension_numbers = #tpu.dot_dimension_numbers<[1], [0], [0], [1], [0, 0, 1, 1], [], []>} : vector<16x128xf32>, vector<128x4xf32>, vector<16x4xf32> -> vector<16x4xf32>
    %c0_3 = arith.constant 0 : index
    %c0_4 = arith.constant 0 : index
    %3 = vector.load %arg3[%c0_3, %c0_4] : memref<16x4xf32, #tpu.memory_space<vmem>>, vector<16x4xf32>
    tpu.vector_store %arg3[%c0_3, %c0_4], %2 {strides = array<i32>} : memref<16x4xf32, #tpu.memory_space<vmem>>, vector<16x4xf32>,
    return
  }
  func.func @transform_0(%arg0: i32) -> (i32, i32) {
    %c0_i32 = arith.constant 0 : i32
    %c0_i32_0 = arith.constant 0 : i32
    return %arg0, %c0_i32 : i32, i32
  }
  func.func @transform_1(%arg0: i32) -> (i32, i32) {
    %c0_i32 = arith.constant 0 : i32
    %c0_i32_0 = arith.constant 0 : i32
    %c0_i32_1 = arith.constant 0 : i32
    return %c0_i32, %c0_i32_0 : i32, i32
  }
  func.func @transform_2(%arg0: i32) -> (i32, i32) {
    %c0_i32 = arith.constant 0 : i32
    %c0_i32_0 = arith.constant 0 : i32
    return %arg0, %c0_i32 : i32, i32
  }
}

module attributes {stable_mosaic.version = 11 : i64} {
  func.func @_grouped_mlp_kernel(%arg0: i32, %arg1: i32, %arg2: memref<8xi32, #tpu.memory_space<smem>>, %arg3: memref<8xi32, #tpu.memory_space<smem>>, %arg4: memref<8x128xf32, #tpu.memory_space<vmem>>, %arg5: memref<1x128x128xf32, #tpu.memory_space<vmem>>, %arg6: memref<1x128x128xf32, #tpu.memory_space<vmem>>, %arg7: memref<1x128x128xf32, #tpu.memory_space<vmem>>, %arg8: memref<8x128xf32, #tpu.memory_space<vmem>>, %arg9: memref<8x128xf32, #tpu.memory_space<vmem>>, %arg10: memref<8x128xf32, #tpu.memory_space<vmem>>, %arg11: memref<8x128xf32, #tpu.memory_space<vmem>>, %arg12: memref<8x128xf32, #tpu.memory_space<vmem>>) attributes {dimension_semantics = [#tpu.dimension_semantics<parallel>, #tpu.dimension_semantics<arbitrary>], iteration_bounds = array<i64: 8, 2>, scalar_prefetch = 2 : i64, scratch_operands = 1 : i64, tpu.core_type = #tpu.core_type<tc>, window_params = [{transform_indices = @transform_0, window_bounds = array<i64: 8, 128>}, {transform_indices = @transform_1, window_bounds = array<i64: 1, 128, 128>}, {transform_indices = @transform_2, window_bounds = array<i64: 1, 128, 128>}, {transform_indices = @transform_3, window_bounds = array<i64: 1, 128, 128>}, {transform_indices = @transform_4, window_bounds = array<i64: 8, 128>}, {transform_indices = @transform_5, window_bounds = array<i64: 8, 128>}, {transform_indices = @transform_6, window_bounds = array<i64: 8, 128>}, {transform_indices = @transform_7, window_bounds = array<i64: 8, 128>}]} {
    %0 = arith.index_cast %arg0 : i32 to index
    %1 = memref.load %arg3[%0] : memref<8xi32, #tpu.memory_space<smem>>
    %c0_i32 = arith.constant 0 : i32
    %2 = arith.cmpi ne, %1, %c0_i32 : i32
    %3 = arith.extui %2 : i1 to i32
    %c0_i32_0 = arith.constant 0 : i32
    %4 = arith.cmpi ne, %3, %c0_i32_0 : i32
    scf.if %4 {
      %c0_i32_1 = arith.constant 0 : i32
      %5 = arith.cmpi eq, %arg1, %c0_i32_1 : i32
      %6 = arith.extui %5 : i1 to i32
      %c0_i32_2 = arith.constant 0 : i32
      %7 = arith.cmpi ne, %6, %c0_i32_2 : i32
      scf.if %7 {
        %cst_27 = arith.constant 0.000000e+00 : f32
        %34 = vector.broadcast %cst_27 : f32 to vector<8x128xf32>
        %c0_28 = arith.constant 0 : index
        %c0_29 = arith.constant 0 : index
        %35 = vector.load %arg12[%c0_28, %c0_29] : memref<8x128xf32, #tpu.memory_space<vmem>>, vector<8x128xf32>
        tpu.vector_store %arg12[%c0_28, %c0_29], %34 {strides = array<i32>} : memref<8x128xf32, #tpu.memory_space<vmem>>, vector<8x128xf32>,
      } else {
      }
      %c0 = arith.constant 0 : index
      %c0_3 = arith.constant 0 : index
      %8 = vector.load %arg4[%c0, %c0_3] : memref<8x128xf32, #tpu.memory_space<vmem>>, vector<8x128xf32>
      %c0_4 = arith.constant 0 : index
      %c0_5 = arith.constant 0 : index
      %c0_6 = arith.constant 0 : index
      %9 = vector.load %arg5[%c0_4, %c0_5, %c0_6] : memref<1x128x128xf32, #tpu.memory_space<vmem>>, vector<1x128x128xf32>
      %10 = vector.shape_cast %9 : vector<1x128x128xf32> to vector<128x128xf32>
      %cst = arith.constant dense<0.000000e+00> : vector<8x128xf32>
      %11 = tpu.matmul %8, %10, %cst {dimension_numbers = #tpu.dot_dimension_numbers<[1], [0], [0], [1], [0, 0, 1, 1], [], []>} : vector<8x128xf32>, vector<128x128xf32>, vector<8x128xf32> -> vector<8x128xf32>
      %c0_7 = arith.constant 0 : index
      %c0_8 = arith.constant 0 : index
      %c0_9 = arith.constant 0 : index
      %12 = vector.load %arg6[%c0_7, %c0_8, %c0_9] : memref<1x128x128xf32, #tpu.memory_space<vmem>>, vector<1x128x128xf32>
      %13 = vector.shape_cast %12 : vector<1x128x128xf32> to vector<128x128xf32>
      %cst_10 = arith.constant dense<0.000000e+00> : vector<8x128xf32>
      %14 = tpu.matmul %8, %13, %cst_10 {dimension_numbers = #tpu.dot_dimension_numbers<[1], [0], [0], [1], [0, 0, 1, 1], [], []>} : vector<8x128xf32>, vector<128x128xf32>, vector<8x128xf32> -> vector<8x128xf32>
      %15 = arith.negf %11 : vector<8x128xf32>
      %16 = math.exp %15 : vector<8x128xf32>
      %cst_11 = arith.constant 1.000000e+00 : f32
      %17 = vector.broadcast %cst_11 : f32 to vector<8x128xf32>
      %18 = arith.addf %17, %16 : vector<8x128xf32>
      %19 = arith.divf %17, %18 : vector<8x128xf32>
      %20 = arith.mulf %11, %19 : vector<8x128xf32>
      %21 = arith.mulf %20, %14 : vector<8x128xf32>
      %c0_12 = arith.constant 0 : index
      %c0_13 = arith.constant 0 : index
      %22 = vector.load %arg12[%c0_12, %c0_13] : memref<8x128xf32, #tpu.memory_space<vmem>>, vector<8x128xf32>
      %c0_14 = arith.constant 0 : index
      %c0_15 = arith.constant 0 : index
      %c0_16 = arith.constant 0 : index
      %23 = vector.load %arg7[%c0_14, %c0_15, %c0_16] : memref<1x128x128xf32, #tpu.memory_space<vmem>>, vector<1x128x128xf32>
      %24 = vector.shape_cast %23 : vector<1x128x128xf32> to vector<128x128xf32>
      %cst_17 = arith.constant dense<0.000000e+00> : vector<8x128xf32>
      %25 = tpu.matmul %21, %24, %cst_17 {dimension_numbers = #tpu.dot_dimension_numbers<[1], [0], [0], [1], [0, 0, 1, 1], [], []>} : vector<8x128xf32>, vector<128x128xf32>, vector<8x128xf32> -> vector<8x128xf32>
      %26 = arith.addf %22, %25 : vector<8x128xf32>
      %c0_18 = arith.constant 0 : index
      %c0_19 = arith.constant 0 : index
      %27 = vector.load %arg12[%c0_18, %c0_19] : memref<8x128xf32, #tpu.memory_space<vmem>>, vector<8x128xf32>
      tpu.vector_store %arg12[%c0_18, %c0_19], %26 {strides = array<i32>} : memref<8x128xf32, #tpu.memory_space<vmem>>, vector<8x128xf32>,
      %c0_20 = arith.constant 0 : index
      %c0_21 = arith.constant 0 : index
      %28 = vector.load %arg9[%c0_20, %c0_21] : memref<8x128xf32, #tpu.memory_space<vmem>>, vector<8x128xf32>
      tpu.vector_store %arg9[%c0_20, %c0_21], %11 {strides = array<i32>} : memref<8x128xf32, #tpu.memory_space<vmem>>, vector<8x128xf32>,
      %c0_22 = arith.constant 0 : index
      %c0_23 = arith.constant 0 : index
      %29 = vector.load %arg10[%c0_22, %c0_23] : memref<8x128xf32, #tpu.memory_space<vmem>>, vector<8x128xf32>
      tpu.vector_store %arg10[%c0_22, %c0_23], %14 {strides = array<i32>} : memref<8x128xf32, #tpu.memory_space<vmem>>, vector<8x128xf32>,
      %c0_24 = arith.constant 0 : index
      %c0_25 = arith.constant 0 : index
      %30 = vector.load %arg11[%c0_24, %c0_25] : memref<8x128xf32, #tpu.memory_space<vmem>>, vector<8x128xf32>
      tpu.vector_store %arg11[%c0_24, %c0_25], %21 {strides = array<i32>} : memref<8x128xf32, #tpu.memory_space<vmem>>, vector<8x128xf32>,
      %c1_i32 = arith.constant 1 : i32
      %31 = arith.cmpi eq, %arg1, %c1_i32 : i32
      %32 = arith.extui %31 : i1 to i32
      %c0_i32_26 = arith.constant 0 : i32
      %33 = arith.cmpi ne, %32, %c0_i32_26 : i32
      scf.if %33 {
        %c0_27 = arith.constant 0 : index
        %c0_28 = arith.constant 0 : index
        %34 = vector.load %arg12[%c0_27, %c0_28] : memref<8x128xf32, #tpu.memory_space<vmem>>, vector<8x128xf32>
        %c0_29 = arith.constant 0 : index
        %c0_30 = arith.constant 0 : index
        %35 = vector.load %arg8[%c0_29, %c0_30] : memref<8x128xf32, #tpu.memory_space<vmem>>, vector<8x128xf32>
        tpu.vector_store %arg8[%c0_29, %c0_30], %34 {strides = array<i32>} : memref<8x128xf32, #tpu.memory_space<vmem>>, vector<8x128xf32>,
      } else {
      }
    } else {
    }
    return
  }
  func.func @transform_0(%arg0: i32, %arg1: i32, %arg2: memref<8xi32, #tpu.memory_space<smem>>, %arg3: memref<8xi32, #tpu.memory_space<smem>>) -> (i32, i32) {
    %c0_i32 = arith.constant 0 : i32
    %c0_i32_0 = arith.constant 0 : i32
    return %arg0, %c0_i32 : i32, i32
  }
  func.func @transform_1(%arg0: i32, %arg1: i32, %arg2: memref<8xi32, #tpu.memory_space<smem>>, %arg3: memref<8xi32, #tpu.memory_space<smem>>) -> (i32, i32, i32) {
    %0 = arith.index_cast %arg0 : i32 to index
    %1 = memref.load %arg2[%0] : memref<8xi32, #tpu.memory_space<smem>>
    %c0_i32 = arith.constant 0 : i32
    %c0_i32_0 = arith.constant 0 : i32
    return %1, %c0_i32, %arg1 : i32, i32, i32
  }
  func.func @transform_2(%arg0: i32, %arg1: i32, %arg2: memref<8xi32, #tpu.memory_space<smem>>, %arg3: memref<8xi32, #tpu.memory_space<smem>>) -> (i32, i32, i32) {
    %0 = arith.index_cast %arg0 : i32 to index
    %1 = memref.load %arg2[%0] : memref<8xi32, #tpu.memory_space<smem>>
    %c0_i32 = arith.constant 0 : i32
    %c0_i32_0 = arith.constant 0 : i32
    return %1, %c0_i32, %arg1 : i32, i32, i32
  }
  func.func @transform_3(%arg0: i32, %arg1: i32, %arg2: memref<8xi32, #tpu.memory_space<smem>>, %arg3: memref<8xi32, #tpu.memory_space<smem>>) -> (i32, i32, i32) {
    %0 = arith.index_cast %arg0 : i32 to index
    %1 = memref.load %arg2[%0] : memref<8xi32, #tpu.memory_space<smem>>
    %c0_i32 = arith.constant 0 : i32
    %c0_i32_0 = arith.constant 0 : i32
    return %1, %arg1, %c0_i32 : i32, i32, i32
  }
  func.func @transform_4(%arg0: i32, %arg1: i32, %arg2: memref<8xi32, #tpu.memory_space<smem>>, %arg3: memref<8xi32, #tpu.memory_space<smem>>) -> (i32, i32) {
    %c0_i32 = arith.constant 0 : i32
    %c0_i32_0 = arith.constant 0 : i32
    return %arg0, %c0_i32 : i32, i32
  }
  func.func @transform_5(%arg0: i32, %arg1: i32, %arg2: memref<8xi32, #tpu.memory_space<smem>>, %arg3: memref<8xi32, #tpu.memory_space<smem>>) -> (i32, i32) {
    %c0_i32 = arith.constant 0 : i32
    return %arg0, %arg1 : i32, i32
  }
  func.func @transform_6(%arg0: i32, %arg1: i32, %arg2: memref<8xi32, #tpu.memory_space<smem>>, %arg3: memref<8xi32, #tpu.memory_space<smem>>) -> (i32, i32) {
    %c0_i32 = arith.constant 0 : i32
    return %arg0, %arg1 : i32, i32
  }
  func.func @transform_7(%arg0: i32, %arg1: i32, %arg2: memref<8xi32, #tpu.memory_space<smem>>, %arg3: memref<8xi32, #tpu.memory_space<smem>>) -> (i32, i32) {
    %c0_i32 = arith.constant 0 : i32
    return %arg0, %arg1 : i32, i32
  }
}

module attributes {stable_mosaic.version = 11 : i64} {
  func.func @_combine_kernel(%arg0: i32, %arg1: memref<2x16x128xf32, #tpu.memory_space<vmem>>, %arg2: memref<2x16x1xf32, #tpu.memory_space<vmem>>, %arg3: memref<16x128xf32, #tpu.memory_space<vmem>>) attributes {dimension_semantics = [#tpu.dimension_semantics<parallel>], iteration_bounds = array<i64: 1>, scalar_prefetch = 0 : i64, scratch_operands = 0 : i64, tpu.core_type = #tpu.core_type<tc>, window_params = [{transform_indices = @transform_0, window_bounds = array<i64: 2, 16, 128>}, {transform_indices = @transform_1, window_bounds = array<i64: 2, 16, 1>}, {transform_indices = @transform_2, window_bounds = array<i64: 16, 128>}]} {
    %c0 = arith.constant 0 : index
    %c0_0 = arith.constant 0 : index
    %c0_1 = arith.constant 0 : index
    %0 = vector.load %arg1[%c0, %c0_0, %c0_1] : memref<2x16x128xf32, #tpu.memory_space<vmem>>, vector<1x16x128xf32>
    %1 = vector.shape_cast %0 : vector<1x16x128xf32> to vector<16x128xf32>
    %c0_2 = arith.constant 0 : index
    %c0_3 = arith.constant 0 : index
    %c0_4 = arith.constant 0 : index
    %2 = vector.load %arg2[%c0_2, %c0_3, %c0_4] : memref<2x16x1xf32, #tpu.memory_space<vmem>>, vector<1x16x1xf32>
    %3 = vector.shape_cast %2 : vector<1x16x1xf32> to vector<16x1xf32>
    %4 = vector.broadcast %3 : vector<16x1xf32> to vector<16x128xf32>
    %5 = arith.mulf %1, %4 : vector<16x128xf32>
    %c1 = arith.constant 1 : index
    %c0_5 = arith.constant 0 : index
    %c0_6 = arith.constant 0 : index
    %6 = vector.load %arg1[%c1, %c0_5, %c0_6] : memref<2x16x128xf32, #tpu.memory_space<vmem>>, vector<1x16x128xf32>
    %7 = vector.shape_cast %6 : vector<1x16x128xf32> to vector<16x128xf32>
    %c1_7 = arith.constant 1 : index
    %c0_8 = arith.constant 0 : index
    %c0_9 = arith.constant 0 : index
    %8 = vector.load %arg2[%c1_7, %c0_8, %c0_9] : memref<2x16x1xf32, #tpu.memory_space<vmem>>, vector<1x16x1xf32>
    %9 = vector.shape_cast %8 : vector<1x16x1xf32> to vector<16x1xf32>
    %10 = vector.broadcast %9 : vector<16x1xf32> to vector<16x128xf32>
    %11 = arith.mulf %7, %10 : vector<16x128xf32>
    %12 = arith.addf %5, %11 : vector<16x128xf32>
    %c0_10 = arith.constant 0 : index
    %c0_11 = arith.constant 0 : index
    %13 = vector.load %arg3[%c0_10, %c0_11] : memref<16x128xf32, #tpu.memory_space<vmem>>, vector<16x128xf32>
    tpu.vector_store %arg3[%c0_10, %c0_11], %12 {strides = array<i32>} : memref<16x128xf32, #tpu.memory_space<vmem>>, vector<16x128xf32>,
    return
  }
  func.func @transform_0(%arg0: i32) -> (i32, i32, i32) {
    %c0_i32 = arith.constant 0 : i32
    %c0_i32_0 = arith.constant 0 : i32
    %c0_i32_1 = arith.constant 0 : i32
    return %c0_i32, %arg0, %c0_i32_0 : i32, i32, i32
  }
  func.func @transform_1(%arg0: i32) -> (i32, i32, i32) {
    %c0_i32 = arith.constant 0 : i32
    %c0_i32_0 = arith.constant 0 : i32
    %c0_i32_1 = arith.constant 0 : i32
    return %c0_i32, %arg0, %c0_i32_0 : i32, i32, i32
  }
  func.func @transform_2(%arg0: i32) -> (i32, i32) {
    %c0_i32 = arith.constant 0 : i32
    %c0_i32_0 = arith.constant 0 : i32
    return %arg0, %c0_i32 : i32, i32
  }
}

</mosaic_0001>

<llo_original>
// kernel: qwen3_moe_grouped_gemm_forward.3
$region0: #{qwen3_moe_grouped_gemm_forward.3}
  #allocation0 [shape = 'u32[]', space=smem, size = 0x4, offset = 0x4, fixed_abs, tag = 'smem constant byte address 0x4 - core index']
  #allocation1 [shape = 'u32[72,128]{1,0:T(1,128)}', space=vmem, size = 0x9000, scoped, tag = 'internal scratch']
  %s0 = inlined_call_operand.vmem [shape: f32[16,128], index: 0, kind: input, shape index: {}]
  %s1 = inlined_call_operand.vmem [shape: f32[128,4], index: 1, kind: input, shape index: {}]
  %s2 = inlined_call_operand.vmem [shape: f32[16,4], index: 2, kind: output, shape index: {}]
  %s3 = sld [smem:[#allocation0]]
  $region18: #{qwen3_moe_grouped_gemm_forward.3} parent=0
    _
  %s5 = ssub.s32 1, %s3
  %s6 = scalar_select 0, %s5, %s3
  // Predicated region
  $region2: #{qwen3_moe_grouped_gemm_forward.3} parent=0 // pred_check
    _
  $region3: #{qwen3_moe_grouped_gemm_forward.3} parent=0 // pred_check_branch
    %8 = sbr.rel (0) target = $region5
  $region4: #{qwen3_moe_grouped_gemm_forward.3} parent=0 // pred_region
    _
  $region5: #{qwen3_moe_grouped_gemm_forward.3} parent=0 // pred_fallthru
    _
  // Predicated region
  $region6: #{qwen3_moe_grouped_gemm_forward.3} parent=0 // pred_check
    _
  $region7: #{qwen3_moe_grouped_gemm_forward.3} parent=0 // pred_check_branch
    %10 = sbr.rel (0) target = $region9
  $region8: #{qwen3_moe_grouped_gemm_forward.3} parent=0 // pred_region
    _
  $region9: #{qwen3_moe_grouped_gemm_forward.3} parent=0 // pred_fallthru
    _
  %v11 = vld [vmem:[%s0] sm:$0xff]
  %v12 = vld [vmem:[%s0 + $0x8] sm:$0xff]
  %v13 = vld [vmem:[%s1] sm:$0xff]
  %v14 = vld [vmem:[%s1 + $0x8] sm:$0xff]
  %v15 = vld [vmem:[%s1 + $0x10] sm:$0xff]
  %v16 = vld [vmem:[%s1 + $0x18] sm:$0xff]
  %v17 = vld [vmem:[%s1 + $0x20] sm:$0xff]
  %v18 = vld [vmem:[%s1 + $0x28] sm:$0xff]
  %v19 = vld [vmem:[%s1 + $0x30] sm:$0xff]
  %v20 = vld [vmem:[%s1 + $0x38] sm:$0xff]
  %v21 = vld [vmem:[%s1 + $0x40] sm:$0xff]
  %v22 = vld [vmem:[%s1 + $0x48] sm:$0xff]
  %v23 = vld [vmem:[%s1 + $0x50] sm:$0xff]
  %v24 = vld [vmem:[%s1 + $0x58] sm:$0xff]
  %v25 = vld [vmem:[%s1 + $0x60] sm:$0xff]
  %v26 = vld [vmem:[%s1 + $0x68] sm:$0xff]
  %v27 = vld [vmem:[%s1 + $0x70] sm:$0xff]
  %v28 = vld [vmem:[%s1 + $0x78] sm:$0xff]
  %29 = vmatpush.msra.mxu0 %v28
  %30 = vmatpush.msra.mxu0 %v27
  %31 = vmatpush.msra.mxu0 %v26
  %32 = vmatpush.msra.mxu0 %v25
  %33 = vmatpush.msra.mxu0 %v24
  %34 = vmatpush.msra.mxu0 %v23
  %35 = vmatpush.msra.mxu0 %v22
  %36 = vmatpush.msra.mxu0 %v21
  %37 = vmatpush.msra.mxu0 %v20
  %38 = vmatpush.msra.mxu0 %v19
  %39 = vmatpush.msra.mxu0 %v18
  %40 = vmatpush.msra.mxu0 %v17
  %41 = vmatpush.msra.mxu0 %v16
  %42 = vmatpush.msra.mxu0 %v15
  %43 = vmatpush.msra.mxu0 %v14
  %44 = vmatpush.msra.mxu0 %v13
  %45 = vmatmul.f32.gmra.mxu0 %v11
  %v46 = vpop.f32.mrf.mxu0
  %v47 = vadd.f32 0.0, %v46
  %48 = vmatmul.f32.gmra.mxu0 %v12
  %v49 = vpop.f32.mrf.mxu0
  %v50 = vadd.f32 0.0, %v49
  %51 = vdwg.mxu0
  %vm52 = vcmask 31744
  %53 = vst.msk [vmem:[%s2] sm:$0xff] %vm52, %v47
  %54 = vst.msk [vmem:[%s2 + $0x8] sm:$0xff] %vm52, %v50
  // Predicated region
  $region10: #{qwen3_moe_grouped_gemm_forward.3} parent=0 // pred_check
    _
  $region11: #{qwen3_moe_grouped_gemm_forward.3} parent=0 // pred_check_branch
    %56 = sbr.rel (0) target = $region13
  $region12: #{qwen3_moe_grouped_gemm_forward.3} parent=0 // pred_region
    _
  $region13: #{qwen3_moe_grouped_gemm_forward.3} parent=0 // pred_fallthru
    _
  // Predicated region
  $region14: #{qwen3_moe_grouped_gemm_forward.3} parent=0 // pred_check
    _
  $region15: #{qwen3_moe_grouped_gemm_forward.3} parent=0 // pred_check_branch
    %58 = sbr.rel (0) target = $region17
  $region16: #{qwen3_moe_grouped_gemm_forward.3} parent=0 // pred_region
    _
  $region17: #{qwen3_moe_grouped_gemm_forward.3} parent=0 // pred_fallthru
    _

// kernel: custom-call.2
$region0: #{custom-call.2}
  %s0 = inlined_call_operand.vmem [shape: u32[8], index: 0, kind: output, shape index: {}]

// kernel: qwen3_moe_grouped_gemm_forward.4
$region0: #{qwen3_moe_grouped_gemm_forward.4}
  #allocation0 [shape = 'u32[]', space=smem, size = 0x4, offset = 0x4, fixed_abs, tag = 'smem constant byte address 0x4 - core index']
  #allocation1 [shape = 'u32[72,128]{1,0:T(1,128)}', space=vmem, size = 0x9000, scoped, tag = 'internal scratch']
  #allocation2 [shape = 'f32[8,128]{1,0:T(8,128)}', space=vmem, size = 0x1000, scoped, tag = 'scratch operand']
  #allocation3 [shape = 's32[1]{0}', space=sflag, size = 0x4, scoped, tag = 'scoped memory for qwen3_moe_grouped_gemm_forward.4']
  #allocation4 [shape = 'u8[512]{0}', space=smem, size = 0x200, scoped, tag = 'prefetched SMEM operand 0']
  #allocation5 [shape = 'u8[512]{0}', space=smem, size = 0x200, scoped, tag = 'prefetched SMEM operand 1']
  %s0 = inlined_call_operand.vmem [shape: s32[8], index: 0, kind: input, shape index: {}]
  %s1 = inlined_call_operand.vmem [shape: s32[8], index: 1, kind: input, shape index: {}]
  %s2 = inlined_call_operand.vmem [shape: f32[64,128], index: 2, kind: input, shape index: {}]
  %s3 = inlined_call_operand.vmem [shape: f32[4,128,256], index: 3, kind: input, shape index: {}]
  %s4 = inlined_call_operand.vmem [shape: f32[4,128,256], index: 4, kind: input, shape index: {}]
  %s5 = inlined_call_operand.vmem [shape: f32[4,256,128], index: 5, kind: input, shape index: {}]
  %s6 = inlined_call_operand.vmem [shape: f32[64,128], index: 6, kind: output, shape index: {0}]
  %s7 = inlined_call_operand.vmem [shape: f32[64,256], index: 7, kind: output, shape index: {1}]
  %s8 = inlined_call_operand.vmem [shape: f32[64,256], index: 8, kind: output, shape index: {2}]
  %s9 = inlined_call_operand.vmem [shape: f32[64,256], index: 9, kind: output, shape index: {3}]
  %10 = xla_tuple %s6, %s7, %s8, %s9
  %s11 = sld [smem:[#allocation0]]
  $region161: #{qwen3_moe_grouped_gemm_forward.4} parent=0
    _
  %s13 = ssub.s32 1, %s11
  %s14 = scalar_select 0, %s13, %s11
  %s16 = sshll.u32 %s0, 4
  %s17 = int_to_ptr.vmem [resolvable:$true] %s16
  %19 = dma.vmem_to_smem %s17, 16, [#allocation4], [#allocation3]
  %s21 = sshll.u32 %s1, 4
  %s22 = int_to_ptr.vmem [resolvable:$true] %s21
  %24 = dma.vmem_to_smem %s22, 16, [#allocation5], [#allocation3]
  %26 = dma.done [#allocation3], 32
  %27 = sfence
  $region1: #{qwen3_moe_grouped_gemm_forward.4} parent=0
    #allocation6 [shape = 'u8[131072]{0}', space=vmem, size = 0x20000, scoped, tag = 'input window, operand 3']
    #allocation7 [shape = 'u8[131072]{0}', space=vmem, size = 0x20000, scoped, tag = 'input window, operand 4']
    loop: start=0, step=1, limit=18
    $region2: #{qwen3_moe_grouped_gemm_forward.4} parent=1 // loop_pre_header
      _
    $region3: #{qwen3_moe_grouped_gemm_forward.4} parent=1 // loop_header
      %s29 = sphi 0, %s33
      %p30 = scmp.ge.s32.totalorder %s29, 18
      %s36 = sphi 0, %s48
      %s37 = sphi 0, %s44
      %s38 = sphi 0, %s36
      %s39 = sphi 0, %s37
      %s40 = sphi 0, %s38
      %s41 = sphi 0, %s39
      %s51 = sphi 0, %s53
      %s54 = sphi 0, %s51
      %s55 = sphi 0, %s54
      %s71 = sphi 0, %s55
      %s81 = sphi 0, %s83
      %s84 = sphi 0, %s81
      %s85 = sphi 0, %s84
      %s101 = sphi 0, %s85
      %s111 = sphi 0, %s113
      %s114 = sphi 0, %s111
      %s115 = sphi 0, %s114
      %s131 = sphi 0, %s115
      %s141 = sphi 0, %s143
      %s144 = sphi 0, %s141
      %s145 = sphi 0, %s144
      %s161 = sphi 0, %s145
      %s167 = sphi 0, %s169
      %s170 = sphi 0, %s167
      %s171 = sphi 0, %s170
      %s187 = sphi 0, %s171
      %s195 = sphi 0, %s197
      %s198 = sphi 0, %s195
      %s199 = sphi 0, %s198
      %s215 = sphi 0, %s199
      %s223 = sphi 0, %s225
      %s226 = sphi 0, %s223
      %s227 = sphi 0, %s226
      %s243 = sphi 0, %s227
      %s251 = sphi 0, %s253
      %s254 = sphi 0, %s251
      %s255 = sphi 0, %s254
      %s271 = sphi 0, %s255
    $region4: #{qwen3_moe_grouped_gemm_forward.4} parent=1 // loop_header_branch
      %32 = sbr.rel (%p30) target = $region8
    $region5: #{qwen3_moe_grouped_gemm_forward.4} parent=1 // loop_body
      %s34 = ssub.s32 %s29, 1
      %s35 = ssub.s32 %s29, 2
      %s42 = sadd.s32 1, %s37
      %p43 = scmp.ge.s32.totalorder %s42, 2
      %s44 = scalar_select %p43, 0, %s42
      %s45 = sadd.s32 1, %s36
      %s46 = scalar_select %p43, %s45, %s36
      %p47 = scmp.ge.s32.totalorder %s46, 8
      %s48 = scalar_select %p47, 0, %s46
      %s49 = ssub.s32 %s36, %s48
      %p50 = scmp.eq.s32.totalorder %s49, 0
      %s52 = sadd.s32 %s51, 1
      %s53 = scalar_select %p50, %s51, %s52
      %p56 = pneg %p50
      %p57 = scmp.eq.s32.totalorder %s29, 15
      %p58 = por %p56, %p57
      %p59 = scmp.ne.s32.totalorder %s51, %s54
      %p60 = scmp.eq.s32.totalorder %s29, 0
      %p61 = por %p59, %p60
      %p62 = scmp.ne.s32.totalorder %s51, %s54
      %p63 = scmp.eq.s32.totalorder %s34, 15
      %p64 = por %p62, %p63
      %p65 = scmp.ne.s32.totalorder %s54, %s55
      %p66 = scmp.eq.s32.totalorder %s34, 0
      %p67 = por %p65, %p66
      %p68 = scmp.ne.s32.totalorder %s54, %s55
      %p69 = scmp.eq.s32.totalorder %s35, 15
      %p70 = por %p68, %p69
      %p72 = scmp.ne.s32.totalorder %s55, %s71
      %p73 = scmp.eq.s32.totalorder %s35, 0
      %p74 = por %p72, %p73
      %s75 = sld [smem:[#allocation4 + %s36]]
      %s76 = sld [smem:[#allocation4 + %s48]]
      %s77 = ssub.s32 %s75, %s76
      %s78 = ssub.s32 %s37, %s44
      %s79 = sor.u32 %s77, %s78
      %p80 = scmp.eq.s32.totalorder %s79, 0
      %s82 = sadd.s32 %s81, 1
      %s83 = scalar_select %p80, %s81, %s82
      %p86 = pneg %p80
      %p87 = scmp.eq.s32.totalorder %s29, 15
      %p88 = por %p86, %p87
      %p89 = scmp.ne.s32.totalorder %s81, %s84
      %p90 = scmp.eq.s32.totalorder %s29, 0
      %p91 = por %p89, %p90
      %p92 = scmp.ne.s32.totalorder %s81, %s84
      %p93 = scmp.eq.s32.totalorder %s34, 15
      %p94 = por %p92, %p93
      %p95 = scmp.ne.s32.totalorder %s84, %s85
      %p96 = scmp.eq.s32.totalorder %s34, 0
      %p97 = por %p95, %p96
      %p98 = scmp.ne.s32.totalorder %s84, %s85
      %p99 = scmp.eq.s32.totalorder %s35, 15
      %p100 = por %p98, %p99
      %p102 = scmp.ne.s32.totalorder %s85, %s101
      %p103 = scmp.eq.s32.totalorder %s35, 0
      %p104 = por %p102, %p103
      %s105 = sld [smem:[#allocation4 + %s36]]
      %s106 = sld [smem:[#allocation4 + %s48]]
      %s107 = ssub.s32 %s105, %s106
      %s108 = ssub.s32 %s37, %s44
      %s109 = sor.u32 %s107, %s108
      %p110 = scmp.eq.s32.totalorder %s109, 0
      %s112 = sadd.s32 %s111, 1
      %s113 = scalar_select %p110, %s111, %s112
      %p116 = pneg %p110
      %p117 = scmp.eq.s32.totalorder %s29, 15
      %p118 = por %p116, %p117
      %p119 = scmp.ne.s32.totalorder %s111, %s114
      %p120 = scmp.eq.s32.totalorder %s29, 0
      %p121 = por %p119, %p120
      %p122 = scmp.ne.s32.totalorder %s111, %s114
      %p123 = scmp.eq.s32.totalorder %s34, 15
      %p124 = por %p122, %p123
      %p125 = scmp.ne.s32.totalorder %s114, %s115
      %p126 = scmp.eq.s32.totalorder %s34, 0
      %p127 = por %p125, %p126
      %p128 = scmp.ne.s32.totalorder %s114, %s115
      %p129 = scmp.eq.s32.totalorder %s35, 15
      %p130 = por %p128, %p129
      %p132 = scmp.ne.s32.totalorder %s115, %s131
      %p133 = scmp.eq.s32.totalorder %s35, 0
      %p134 = por %p132, %p133
      %s135 = sld [smem:[#allocation4 + %s36]]
      %s136 = sld [smem:[#allocation4 + %s48]]
      %s137 = ssub.s32 %s135, %s136
      %s138 = ssub.s32 %s37, %s44
      %s139 = sor.u32 %s137, %s138
      %p140 = scmp.eq.s32.totalorder %s139, 0
      %s142 = sadd.s32 %s141, 1
      %s143 = scalar_select %p140, %s141, %s142
      %p146 = pneg %p140
      %p147 = scmp.eq.s32.totalorder %s29, 15
      %p148 = por %p146, %p147
      %p149 = scmp.ne.s32.totalorder %s141, %s144
      %p150 = scmp.eq.s32.totalorder %s29, 0
      %p151 = por %p149, %p150
      %p152 = scmp.ne.s32.totalorder %s141, %s144
      %p153 = scmp.eq.s32.totalorder %s34, 15
      %p154 = por %p152, %p153
      %p155 = scmp.ne.s32.totalorder %s144, %s145
      %p156 = scmp.eq.s32.totalorder %s34, 0
      %p157 = por %p155, %p156
      %p158 = scmp.ne.s32.totalorder %s144, %s145
      %p159 = scmp.eq.s32.totalorder %s35, 15
      %p160 = por %p158, %p159
      %p162 = scmp.ne.s32.totalorder %s145, %s161
      %p163 = scmp.eq.s32.totalorder %s35, 0
      %p164 = por %p162, %p163
      %s165 = ssub.s32 %s36, %s48
      %p166 = scmp.eq.s32.totalorder %s165, 0
      %s168 = sadd.s32 %s167, 1
      %s169 = scalar_select %p166, %s167, %s168
      %p172 = pneg %p166
      %p173 = scmp.eq.s32.totalorder %s29, 15
      %p174 = por %p172, %p173
      %p175 = scmp.ne.s32.totalorder %s167, %s170
      %p176 = scmp.eq.s32.totalorder %s29, 0
      %p177 = por %p175, %p176
      %p178 = scmp.ne.s32.totalorder %s167, %s170
      %p179 = scmp.eq.s32.totalorder %s34, 15
      %p180 = por %p178, %p179
      %p181 = scmp.ne.s32.totalorder %s170, %s171
      %p182 = scmp.eq.s32.totalorder %s34, 0
      %p183 = por %p181, %p182
      %p184 = scmp.ne.s32.totalorder %s170, %s171
      %p185 = scmp.eq.s32.totalorder %s35, 15
      %p186 = por %p184, %p185
      %p188 = scmp.ne.s32.totalorder %s171, %s187
      %p189 = scmp.eq.s32.totalorder %s35, 0
      %p190 = por %p188, %p189
      %s191 = ssub.s32 %s36, %s48
      %s192 = ssub.s32 %s37, %s44
      %s193 = sor.u32 %s191, %s192
      %p194 = scmp.eq.s32.totalorder %s193, 0
      %s196 = sadd.s32 %s195, 1
      %s197 = scalar_select %p194, %s195, %s196
      %p200 = pneg %p194
      %p201 = scmp.eq.s32.totalorder %s29, 15
      %p202 = por %p200, %p201
      %p203 = scmp.ne.s32.totalorder %s195, %s198
      %p204 = scmp.eq.s32.totalorder %s29, 0
      %p205 = por %p203, %p204
      %p206 = scmp.ne.s32.totalorder %s195, %s198
      %p207 = scmp.eq.s32.totalorder %s34, 15
      %p208 = por %p206, %p207
      %p209 = scmp.ne.s32.totalorder %s198, %s199
      %p210 = scmp.eq.s32.totalorder %s34, 0
      %p211 = por %p209, %p210
      %p212 = scmp.ne.s32.totalorder %s198, %s199
      %p213 = scmp.eq.s32.totalorder %s35, 15
      %p214 = por %p212, %p213
      %p216 = scmp.ne.s32.totalorder %s199, %s215
      %p217 = scmp.eq.s32.totalorder %s35, 0
      %p218 = por %p216, %p217
      %s219 = ssub.s32 %s36, %s48
      %s220 = ssub.s32 %s37, %s44
      %s221 = sor.u32 %s219, %s220
      %p222 = scmp.eq.s32.totalorder %s221, 0
      %s224 = sadd.s32 %s223, 1
      %s225 = scalar_select %p222, %s223, %s224
      %p228 = pneg %p222
      %p229 = scmp.eq.s32.totalorder %s29, 15
      %p230 = por %p228, %p229
      %p231 = scmp.ne.s32.totalorder %s223, %s226
      %p232 = scmp.eq.s32.totalorder %s29, 0
      %p233 = por %p231, %p232
      %p234 = scmp.ne.s32.totalorder %s223, %s226
      %p235 = scmp.eq.s32.totalorder %s34, 15
      %p236 = por %p234, %p235
      %p237 = scmp.ne.s32.totalorder %s226, %s227
      %p238 = scmp.eq.s32.totalorder %s34, 0
      %p239 = por %p237, %p238
      %p240 = scmp.ne.s32.totalorder %s226, %s227
      %p241 = scmp.eq.s32.totalorder %s35, 15
      %p242 = por %p240, %p241
      %p244 = scmp.ne.s32.totalorder %s227, %s243
      %p245 = scmp.eq.s32.totalorder %s35, 0
      %p246 = por %p244, %p245
      %s247 = ssub.s32 %s36, %s48
      %s248 = ssub.s32 %s37, %s44
      %s249 = sor.u32 %s247, %s248
      %p250 = scmp.eq.s32.totalorder %s249, 0
      %s252 = sadd.s32 %s251, 1
      %s253 = scalar_select %p250, %s251, %s252
      %p256 = pneg %p250
      %p257 = scmp.eq.s32.totalorder %s29, 15
      %p258 = por %p256, %p257
      %p259 = scmp.ne.s32.totalorder %s251, %s254
      %p260 = scmp.eq.s32.totalorder %s29, 0
      %p261 = por %p259, %p260
      %p262 = scmp.ne.s32.totalorder %s251, %s254
      %p263 = scmp.eq.s32.totalorder %s34, 15
      %p264 = por %p262, %p263
      %p265 = scmp.ne.s32.totalorder %s254, %s255
      %p266 = scmp.eq.s32.totalorder %s34, 0
      %p267 = por %p265, %p266
      %p268 = scmp.ne.s32.totalorder %s254, %s255
      %p269 = scmp.eq.s32.totalorder %s35, 15
      %p270 = por %p268, %p269
      %p272 = scmp.ne.s32.totalorder %s255, %s271
      %p273 = scmp.eq.s32.totalorder %s35, 0
      %p274 = por %p272, %p273
      %p275 = scmp.le.s32.totalorder 1, %s29
      %p276 = scmp.lt.s32.totalorder %s29, 17
      %p277 = pnand %p275, %p276
      %p278 = pneg %p277
      // Predicated region
      $region9: #{qwen3_moe_grouped_gemm_forward.4} parent=5 // pred_check
        _
      $region10: #{qwen3_moe_grouped_gemm_forward.4} parent=5 // pred_check_branch
        %280 = sbr.rel (%p277) target = $region12
      $region11: #{qwen3_moe_grouped_gemm_forward.4} parent=5 // pred_region
        %s281 = ssub.s32 %s29, 1
      $region12: #{qwen3_moe_grouped_gemm_forward.4} parent=5 // pred_fallthru
        _
      %p282 = scmp.lt.s32.totalorder %s29, 16
      // Predicated region
      $region13: #{qwen3_moe_grouped_gemm_forward.4} parent=5 // pred_check
        %p283 = pneg %p282
      $region14: #{qwen3_moe_grouped_gemm_forward.4} parent=5 // pred_check_branch
        %285 = sbr.rel (%p283) target = $region16
      $region15: #{qwen3_moe_grouped_gemm_forward.4} parent=5 // pred_region
        // Predicated region
        $region17: #{qwen3_moe_grouped_gemm_forward.4} parent=15 // pred_check
          %p286 = pneg %p61
        $region18: #{qwen3_moe_grouped_gemm_forward.4} parent=15 // pred_check_branch
          %288 = sbr.rel (%p286) target = $region20
        $region19: #{qwen3_moe_grouped_gemm_forward.4} parent=15 // pred_region
          %p289 = scmp.lt.s32.totalorder %s36, 7
          %s290 = scalar_select %p289, %s36, 7
          %s291 = smul.addr %s290, 8
          %s292 = scalar_lea.vmem %s2, %s291
        $region20: #{qwen3_moe_grouped_gemm_forward.4} parent=15 // pred_fallthru
          _
        // Predicated region
        $region21: #{qwen3_moe_grouped_gemm_forward.4} parent=15 // pred_check
          %p293 = pneg %p91
        $region22: #{qwen3_moe_grouped_gemm_forward.4} parent=15 // pred_check_branch
          %295 = sbr.rel (%p293) target = $region24
        $region23: #{qwen3_moe_grouped_gemm_forward.4} parent=15 // pred_region
          %s296 = sand.u32 %s81, 1
          %s297 = sand.u32 %s81, 1
          %s298 = smul.addr %s297, 128
          %s299 = scalar_lea.vmem [#allocation6], %s298
          %s300 = sld [smem:[#allocation4 + %s36]]
          %s301 = smul.addr %s300, 32
          %s302 = sadd.s32 %s37, %s301
          %s303 = smul.addr %s302, 8
          %s304 = scalar_lea.vmem %s3, %s303
          // Predicated region
          $region25: #{qwen3_moe_grouped_gemm_forward.4} parent=23 // pred_check
            _
          $region26: #{qwen3_moe_grouped_gemm_forward.4} parent=23 // pred_check_branch
            %306 = sbr.rel (0) target = $region28
          $region27: #{qwen3_moe_grouped_gemm_forward.4} parent=23 // pred_region
            // Predicated region
            $region29: #{qwen3_moe_grouped_gemm_forward.4} parent=27 // pred_check
              _
            $region30: #{qwen3_moe_grouped_gemm_forward.4} parent=27 // pred_check_branch
              %308 = sbr.rel (0) target = $region32
            $region31: #{qwen3_moe_grouped_gemm_forward.4} parent=27 // pred_region
              // Predicated region
              $region44: #{qwen3_moe_grouped_gemm_forward.4} parent=31 // pred_check
                _
              $region45: #{qwen3_moe_grouped_gemm_forward.4} parent=31 // pred_check_branch
                %354 = sbr.rel (0) target = $region47
              $region46: #{qwen3_moe_grouped_gemm_forward.4} parent=31 // pred_region
                loop: start=0, step=1, limit=1
                $region48: #{qwen3_moe_grouped_gemm_forward.4} parent=46 // loop_pre_header
                  _
                $region49: #{qwen3_moe_grouped_gemm_forward.4} parent=46 // loop_header
                  %s356 = sphi 0, %s360
                  %p357 = scmp.ge.s32.totalorder %s356, 1
                  %s361 = sphi %s304, %s304
                  %s362 = sphi %s299, %s299
                $region50: #{qwen3_moe_grouped_gemm_forward.4} parent=46 // loop_header_branch
                  %359 = sbr.rel (%p357) target = $region54
                $region51: #{qwen3_moe_grouped_gemm_forward.4} parent=46 // loop_body
                  %v363 = vld [vmem:[%s361] sm:$0xff]
                  %364 = vst [vmem:[%s362] sm:$0xff] %v363
                  %v365 = vld [vmem:[%s361 + $0x10] sm:$0xff]
                  %366 = vst [vmem:[%s362 + $0x8] sm:$0xff] %v365
                  %v367 = vld [vmem:[%s361 + $0x20] sm:$0xff]
                  %368 = vst [vmem:[%s362 + $0x10] sm:$0xff] %v367
                  %v369 = vld [vmem:[%s361 + $0x30] sm:$0xff]
                  %370 = vst [vmem:[%s362 + $0x18] sm:$0xff] %v369
                  %v371 = vld [vmem:[%s361 + $0x40] sm:$0xff]
                  %372 = vst [vmem:[%s362 + $0x20] sm:$0xff] %v371
                  %v373 = vld [vmem:[%s361 + $0x50] sm:$0xff]
                  %374 = vst [vmem:[%s362 + $0x28] sm:$0xff] %v373
                  %v375 = vld [vmem:[%s361 + $0x60] sm:$0xff]
                  %376 = vst [vmem:[%s362 + $0x30] sm:$0xff] %v375
                  %v377 = vld [vmem:[%s361 + $0x70] sm:$0xff]
                  %378 = vst [vmem:[%s362 + $0x38] sm:$0xff] %v377
                  %v379 = vld [vmem:[%s361 + $0x80] sm:$0xff]
                  %380 = vst [vmem:[%s362 + $0x40] sm:$0xff] %v379
                  %v381 = vld [vmem:[%s361 + $0x90] sm:$0xff]
                  %382 = vst [vmem:[%s362 + $0x48] sm:$0xff] %v381
                  %v383 = vld [vmem:[%s361 + $0xa0] sm:$0xff]
                  %384 = vst [vmem:[%s362 + $0x50] sm:$0xff] %v383
                  %v385 = vld [vmem:[%s361 + $0xb0] sm:$0xff]
                  %386 = vst [vmem:[%s362 + $0x58] sm:$0xff] %v385
                  %v387 = vld [vmem:[%s361 + $0xc0] sm:$0xff]
                  %388 = vst [vmem:[%s362 + $0x60] sm:$0xff] %v387
                  %v389 = vld [vmem:[%s361 + $0xd0] sm:$0xff]
                  %390 = vst [vmem:[%s362 + $0x68] sm:$0xff] %v389
                  %v391 = vld [vmem:[%s361 + $0xe0] sm:$0xff]
                  %392 = vst [vmem:[%s362 + $0x70] sm:$0xff] %v391
                  %v393 = vld [vmem:[%s361 + $0xf0] sm:$0xff]
                  %394 = vst [vmem:[%s362 + $0x78] sm:$0xff] %v393
                $region52: #{qwen3_moe_grouped_gemm_forward.4} parent=46 // loop_footer
                  %s360 = sadd.s32 1, %s356
                $region53: #{qwen3_moe_grouped_gemm_forward.4} parent=46 // loop_footer_branch
                  %355 = sbr.rel target = $region49
                $region54: #{qwen3_moe_grouped_gemm_forward.4} parent=46 // loop_exit
                  _
              $region47: #{qwen3_moe_grouped_gemm_forward.4} parent=31 // pred_fallthru
                _
              // Predicated region
              $region55: #{qwen3_moe_grouped_gemm_forward.4} parent=31 // pred_check
                _
              $region56: #{qwen3_moe_grouped_gemm_forward.4} parent=31 // pred_check_branch
                %396 = sbr.rel target = $region58
              $region57: #{qwen3_moe_grouped_gemm_forward.4} parent=31 // pred_region
                _
              $region58: #{qwen3_moe_grouped_gemm_forward.4} parent=31 // pred_fallthru
                _
            $region32: #{qwen3_moe_grouped_gemm_forward.4} parent=27 // pred_fallthru
              _
            // Predicated region
            $region33: #{qwen3_moe_grouped_gemm_forward.4} parent=27 // pred_check
              _
            $region34: #{qwen3_moe_grouped_gemm_forward.4} parent=27 // pred_check_branch
              %310 = sbr.rel target = $region36
            $region35: #{qwen3_moe_grouped_gemm_forward.4} parent=27 // pred_region
              %s312 = ssub.s32 256, 1
              loop: start=0, step=1, limit=1
              $region37: #{qwen3_moe_grouped_gemm_forward.4} parent=35 // loop_pre_header
                _
              $region38: #{qwen3_moe_grouped_gemm_forward.4} parent=35 // loop_header
                %s314 = sphi 0, %s318
                %p315 = scmp.ge.s32.totalorder %s314, 1
                %s319 = sphi %s304, %s304
                %s320 = sphi %s299, %s299
              $region39: #{qwen3_moe_grouped_gemm_forward.4} parent=35 // loop_header_branch
                %317 = sbr.rel (%p315) target = $region43
              $region40: #{qwen3_moe_grouped_gemm_forward.4} parent=35 // loop_body
                %v321 = vld [vmem:[%s319] sm:%s312]
                %322 = vst [vmem:[%s320] sm:%s312] %v321
                %v323 = vld [vmem:[%s319 + $0x10] sm:%s312]
                %324 = vst [vmem:[%s320 + $0x8] sm:%s312] %v323
                %v325 = vld [vmem:[%s319 + $0x20] sm:%s312]
                %326 = vst [vmem:[%s320 + $0x10] sm:%s312] %v325
                %v327 = vld [vmem:[%s319 + $0x30] sm:%s312]
                %328 = vst [vmem:[%s320 + $0x18] sm:%s312] %v327
                %v329 = vld [vmem:[%s319 + $0x40] sm:%s312]
                %330 = vst [vmem:[%s320 + $0x20] sm:%s312] %v329
                %v331 = vld [vmem:[%s319 + $0x50] sm:%s312]
                %332 = vst [vmem:[%s320 + $0x28] sm:%s312] %v331
                %v333 = vld [vmem:[%s319 + $0x60] sm:%s312]
                %334 = vst [vmem:[%s320 + $0x30] sm:%s312] %v333
                %v335 = vld [vmem:[%s319 + $0x70] sm:%s312]
                %336 = vst [vmem:[%s320 + $0x38] sm:%s312] %v335
                %v337 = vld [vmem:[%s319 + $0x80] sm:%s312]
                %338 = vst [vmem:[%s320 + $0x40] sm:%s312] %v337
                %v339 = vld [vmem:[%s319 + $0x90] sm:%s312]
                %340 = vst [vmem:[%s320 + $0x48] sm:%s312] %v339
                %v341 = vld [vmem:[%s319 + $0xa0] sm:%s312]
                %342 = vst [vmem:[%s320 + $0x50] sm:%s312] %v341
                %v343 = vld [vmem:[%s319 + $0xb0] sm:%s312]
                %344 = vst [vmem:[%s320 + $0x58] sm:%s312] %v343
                %v345 = vld [vmem:[%s319 + $0xc0] sm:%s312]
                %346 = vst [vmem:[%s320 + $0x60] sm:%s312] %v345
                %v347 = vld [vmem:[%s319 + $0xd0] sm:%s312]
                %348 = vst [vmem:[%s320 + $0x68] sm:%s312] %v347
                %v349 = vld [vmem:[%s319 + $0xe0] sm:%s312]
                %350 = vst [vmem:[%s320 + $0x70] sm:%s312] %v349
                %v351 = vld [vmem:[%s319 + $0xf0] sm:%s312]
                %352 = vst [vmem:[%s320 + $0x78] sm:%s312] %v351
              $region41: #{qwen3_moe_grouped_gemm_forward.4} parent=35 // loop_footer
                %s318 = sadd.s32 1, %s314
              $region42: #{qwen3_moe_grouped_gemm_forward.4} parent=35 // loop_footer_branch
                %313 = sbr.rel target = $region38
              $region43: #{qwen3_moe_grouped_gemm_forward.4} parent=35 // loop_exit
                _
            $region36: #{qwen3_moe_grouped_gemm_forward.4} parent=27 // pred_fallthru
              _
          $region28: #{qwen3_moe_grouped_gemm_forward.4} parent=23 // pred_fallthru
            _
          %397 = vnop
        $region24: #{qwen3_moe_grouped_gemm_forward.4} parent=15 // pred_fallthru
          _
        // Predicated region
        $region59: #{qwen3_moe_grouped_gemm_forward.4} parent=15 // pred_check
          %p398 = pneg %p121
        $region60: #{qwen3_moe_grouped_gemm_forward.4} parent=15 // pred_check_branch
          %400 = sbr.rel (%p398) target = $region62
        $region61: #{qwen3_moe_grouped_gemm_forward.4} parent=15 // pred_region
          %s401 = sand.u32 %s111, 1
          %s402 = sand.u32 %s111, 1
          %s403 = smul.addr %s402, 128
          %s404 = scalar_lea.vmem [#allocation7], %s403
          %s405 = sld [smem:[#allocation4 + %s36]]
          %s406 = smul.addr %s405, 32
          %s407 = sadd.s32 %s37, %s406
          %s408 = smul.addr %s407, 8
          %s409 = scalar_lea.vmem %s4, %s408
          // Predicated region
          $region63: #{qwen3_moe_grouped_gemm_forward.4} parent=61 // pred_check
            _
          $region64: #{qwen3_moe_grouped_gemm_forward.4} parent=61 // pred_check_branch
            %411 = sbr.rel (0) target = $region66
          $region65: #{qwen3_moe_grouped_gemm_forward.4} parent=61 // pred_region
            // Predicated region
            $region67: #{qwen3_moe_grouped_gemm_forward.4} parent=65 // pred_check
              _
            $region68: #{qwen3_moe_grouped_gemm_forward.4} parent=65 // pred_check_branch
              %413 = sbr.rel (0) target = $region70
            $region69: #{qwen3_moe_grouped_gemm_forward.4} parent=65 // pred_region
              // Predicated region
              $region82: #{qwen3_moe_grouped_gemm_forward.4} parent=69 // pred_check
                _
              $region83: #{qwen3_moe_grouped_gemm_forward.4} parent=69 // pred_check_branch
                %459 = sbr.rel (0) target = $region85
              $region84: #{qwen3_moe_grouped_gemm_forward.4} parent=69 // pred_region
                loop: start=0, step=1, limit=1
                $region86: #{qwen3_moe_grouped_gemm_forward.4} parent=84 // loop_pre_header
                  _
                $region87: #{qwen3_moe_grouped_gemm_forward.4} parent=84 // loop_header
                  %s461 = sphi 0, %s465
                  %p462 = scmp.ge.s32.totalorder %s461, 1
                  %s466 = sphi %s409, %s409
                  %s467 = sphi %s404, %s404
                $region88: #{qwen3_moe_grouped_gemm_forward.4} parent=84 // loop_header_branch
                  %464 = sbr.rel (%p462) target = $region92
                $region89: #{qwen3_moe_grouped_gemm_forward.4} parent=84 // loop_body
                  %v468 = vld [vmem:[%s466] sm:$0xff]
                  %469 = vst [vmem:[%s467] sm:$0xff] %v468
                  %v470 = vld [vmem:[%s466 + $0x10] sm:$0xff]
                  %471 = vst [vmem:[%s467 + $0x8] sm:$0xff] %v470
                  %v472 = vld [vmem:[%s466 + $0x20] sm:$0xff]
                  %473 = vst [vmem:[%s467 + $0x10] sm:$0xff] %v472
                  %v474 = vld [vmem:[%s466 + $0x30] sm:$0xff]
                  %475 = vst [vmem:[%s467 + $0x18] sm:$0xff] %v474
                  %v476 = vld [vmem:[%s466 + $0x40] sm:$0xff]
                  %477 = vst [vmem:[%s467 + $0x20] sm:$0xff] %v476
                  %v478 = vld [vmem:[%s466 + $0x50] sm:$0xff]
                  %479 = vst [vmem:[%s467 + $0x28] sm:$0xff] %v478
                  %v480 = vld [vmem:[%s466 + $0x60] sm:$0xff]
                  %481 = vst [vmem:[%s467 + $0x30] sm:$0xff] %v480
                  %v482 = vld [vmem:[%s466 + $0x70] sm:$0xff]
                  %483 = vst [vmem:[%s467 + $0x38] sm:$0xff] %v482
                  %v484 = vld [vmem:[%s466 + $0x80] sm:$0xff]
                  %485 = vst [vmem:[%s467 + $0x40] sm:$0xff] %v484
                  %v486 = vld [vmem:[%s466 + $0x90] sm:$0xff]
                  %487 = vst [vmem:[%s467 + $0x48] sm:$0xff] %v486
                  %v488 = vld [vmem:[%s466 + $0xa0] sm:$0xff]
                  %489 = vst [vmem:[%s467 + $0x50] sm:$0xff] %v488
                  %v490 = vld [vmem:[%s466 + $0xb0] sm:$0xff]
                  %491 = vst [vmem:[%s467 + $0x58] sm:$0xff] %v490
                  %v492 = vld [vmem:[%s466 + $0xc0] sm:$0xff]
                  %493 = vst [vmem:[%s467 + $0x60] sm:$0xff] %v492
                  %v494 = vld [vmem:[%s466 + $0xd0] sm:$0xff]
                  %495 = vst [vmem:[%s467 + $0x68] sm:$0xff] %v494
                  %v496 = vld [vmem:[%s466 + $0xe0] sm:$0xff]
                  %497 = vst [vmem:[%s467 + $0x70] sm:$0xff] %v496
                  %v498 = vld [vmem:[%s466 + $0xf0] sm:$0xff]
                  %499 = vst [vmem:[%s467 + $0x78] sm:$0xff] %v498
                $region90: #{qwen3_moe_grouped_gemm_forward.4} parent=84 // loop_footer
                  %s465 = sadd.s32 1, %s461
                $region91: #{qwen3_moe_grouped_gemm_forward.4} parent=84 // loop_footer_branch
                  %460 = sbr.rel target = $region87
                $region92: #{qwen3_moe_grouped_gemm_forward.4} parent=84 // loop_exit
                  _
              $region85: #{qwen3_moe_grouped_gemm_forward.4} parent=69 // pred_fallthru
                _
              // Predicated region
              $region93: #{qwen3_moe_grouped_gemm_forward.4} parent=69 // pred_check
                _
              $region94: #{qwen3_moe_grouped_gemm_forward.4} parent=69 // pred_check_branch
                %501 = sbr.rel target = $region96
              $region95: #{qwen3_moe_grouped_gemm_forward.4} parent=69 // pred_region
                _
              $region96: #{qwen3_moe_grouped_gemm_forward.4} parent=69 // pred_fallthru
                _
            $region70: #{qwen3_moe_grouped_gemm_forward.4} parent=65 // pred_fallthru
              _
            // Predicated region
            $region71: #{qwen3_moe_grouped_gemm_forward.4} parent=65 // pred_check
              _
            $region72: #{qwen3_moe_grouped_gemm_forward.4} parent=65 // pred_check_branch
              %415 = sbr.rel target = $region74
            $region73: #{qwen3_moe_grouped_gemm_forward.4} parent=65 // pred_region
              %s417 = ssub.s32 256, 1
              loop: start=0, step=1, limit=1
              $region75: #{qwen3_moe_grouped_gemm_forward.4} parent=73 // loop_pre_header
                _
              $region76: #{qwen3_moe_grouped_gemm_forward.4} parent=73 // loop_header
                %s419 = sphi 0, %s423
                %p420 = scmp.ge.s32.totalorder %s419, 1
                %s424 = sphi %s409, %s409
                %s425 = sphi %s404, %s404
              $region77: #{qwen3_moe_grouped_gemm_forward.4} parent=73 // loop_header_branch
                %422 = sbr.rel (%p420) target = $region81
              $region78: #{qwen3_moe_grouped_gemm_forward.4} parent=73 // loop_body
                %v426 = vld [vmem:[%s424] sm:%s417]
                %427 = vst [vmem:[%s425] sm:%s417] %v426
                %v428 = vld [vmem:[%s424 + $0x10] sm:%s417]
                %429 = vst [vmem:[%s425 + $0x8] sm:%s417] %v428
                %v430 = vld [vmem:[%s424 + $0x20] sm:%s417]
                %431 = vst [vmem:[%s425 + $0x10] sm:%s417] %v430
                %v432 = vld [vmem:[%s424 + $0x30] sm:%s417]
                %433 = vst [vmem:[%s425 + $0x18] sm:%s417] %v432
                %v434 = vld [vmem:[%s424 + $0x40] sm:%s417]
                %435 = vst [vmem:[%s425 + $0x20] sm:%s417] %v434
                %v436 = vld [vmem:[%s424 + $0x50] sm:%s417]
                %437 = vst [vmem:[%s425 + $0x28] sm:%s417] %v436
                %v438 = vld [vmem:[%s424 + $0x60] sm:%s417]
                %439 = vst [vmem:[%s425 + $0x30] sm:%s417] %v438
                %v440 = vld [vmem:[%s424 + $0x70] sm:%s417]
                %441 = vst [vmem:[%s425 + $0x38] sm:%s417] %v440
                %v442 = vld [vmem:[%s424 + $0x80] sm:%s417]
                %443 = vst [vmem:[%s425 + $0x40] sm:%s417] %v442
                %v444 = vld [vmem:[%s424 + $0x90] sm:%s417]
                %445 = vst [vmem:[%s425 + $0x48] sm:%s417] %v444
                %v446 = vld [vmem:[%s424 + $0xa0] sm:%s417]
                %447 = vst [vmem:[%s425 + $0x50] sm:%s417] %v446
                %v448 = vld [vmem:[%s424 + $0xb0] sm:%s417]
                %449 = vst [vmem:[%s425 + $0x58] sm:%s417] %v448
                %v450 = vld [vmem:[%s424 + $0xc0] sm:%s417]
                %451 = vst [vmem:[%s425 + $0x60] sm:%s417] %v450
                %v452 = vld [vmem:[%s424 + $0xd0] sm:%s417]
                %453 = vst [vmem:[%s425 + $0x68] sm:%s417] %v452
                %v454 = vld [vmem:[%s424 + $0xe0] sm:%s417]
                %455 = vst [vmem:[%s425 + $0x70] sm:%s417] %v454
                %v456 = vld [vmem:[%s424 + $0xf0] sm:%s417]
                %457 = vst [vmem:[%s425 + $0x78] sm:%s417] %v456
              $region79: #{qwen3_moe_grouped_gemm_forward.4} parent=73 // loop_footer
                %s423 = sadd.s32 1, %s419
              $region80: #{qwen3_moe_grouped_gemm_forward.4} parent=73 // loop_footer_branch
                %418 = sbr.rel target = $region76
              $region81: #{qwen3_moe_grouped_gemm_forward.4} parent=73 // loop_exit
                _
            $region74: #{qwen3_moe_grouped_gemm_forward.4} parent=65 // pred_fallthru
              _
          $region66: #{qwen3_moe_grouped_gemm_forward.4} parent=61 // pred_fallthru
            _
          %502 = vnop
        $region62: #{qwen3_moe_grouped_gemm_forward.4} parent=15 // pred_fallthru
          _
        // Predicated region
        $region97: #{qwen3_moe_grouped_gemm_forward.4} parent=15 // pred_check
          %p503 = pneg %p151
        $region98: #{qwen3_moe_grouped_gemm_forward.4} parent=15 // pred_check_branch
          %505 = sbr.rel (%p503) target = $region100
        $region99: #{qwen3_moe_grouped_gemm_forward.4} parent=15 // pred_region
          %s506 = sld [smem:[#allocation4 + %s36]]
          %s507 = smul.u32 16, %s37
          %p508 = scmp.lt.s32.totalorder %s506, 3
          %s509 = scalar_select %p508, %s506, 3
          %p510 = scmp.lt.s32.totalorder %s507, 31
          %s511 = scalar_select %p510, %s507, 31
          %s512 = smul.addr %s509, 32
          %s513 = sadd.s32 %s511, %s512
          %s514 = smul.addr %s513, 8
          %s515 = scalar_lea.vmem %s5, %s514
          %s516 = sld [smem:[#allocation4 + %s36]]
          %s517 = smul.u32 16, %s37
        $region100: #{qwen3_moe_grouped_gemm_forward.4} parent=15 // pred_fallthru
          _
      $region16: #{qwen3_moe_grouped_gemm_forward.4} parent=5 // pred_fallthru
        _
      %p518 = scmp.le.s32.totalorder 1, %s29
      %p519 = scmp.lt.s32.totalorder %s29, 17
      %p520 = pnand %p518, %p519
      %p521 = pneg %p520
      // Predicated region
      $region101: #{qwen3_moe_grouped_gemm_forward.4} parent=5 // pred_check
        _
      $region102: #{qwen3_moe_grouped_gemm_forward.4} parent=5 // pred_check_branch
        %523 = sbr.rel (%p520) target = $region104
      $region103: #{qwen3_moe_grouped_gemm_forward.4} parent=5 // pred_region
        %s524 = ssub.s32 %s29, 1
        %s525 = sand.u32 %s84, 1
        %s526 = sand.u32 %s84, 1
        %s527 = smul.addr %s526, 128
        %s528 = scalar_lea.vmem [#allocation6], %s527
        // Predicated region
        $region105: #{qwen3_moe_grouped_gemm_forward.4} parent=103 // pred_check
          %p529 = pneg %p97
        $region106: #{qwen3_moe_grouped_gemm_forward.4} parent=103 // pred_check_branch
          %531 = sbr.rel (%p529) target = $region108
        $region107: #{qwen3_moe_grouped_gemm_forward.4} parent=103 // pred_region
          _
        $region108: #{qwen3_moe_grouped_gemm_forward.4} parent=103 // pred_fallthru
          _
        %s532 = sand.u32 %s114, 1
        %s533 = sand.u32 %s114, 1
        %s534 = smul.addr %s533, 128
        %s535 = scalar_lea.vmem [#allocation7], %s534
        // Predicated region
        $region109: #{qwen3_moe_grouped_gemm_forward.4} parent=103 // pred_check
          %p536 = pneg %p127
        $region110: #{qwen3_moe_grouped_gemm_forward.4} parent=103 // pred_check_branch
          %538 = sbr.rel (%p536) target = $region112
        $region111: #{qwen3_moe_grouped_gemm_forward.4} parent=103 // pred_region
          _
        $region112: #{qwen3_moe_grouped_gemm_forward.4} parent=103 // pred_fallthru
          _
        %p539 = scmp.lt.s32.totalorder %s38, 7
        %s540 = scalar_select %p539, %s38, 7
        %s541 = smul.addr %s540, 8
        %s542 = scalar_lea.vmem %s2, %s541
        %p543 = pneg %p67
        %p544 = pneg %p64
        %s545 = sand.u32 %s84, 1
        %s546 = sand.u32 %s84, 1
        %s547 = smul.addr %s546, 128
        %s548 = scalar_lea.vmem [#allocation6], %s547
        %p549 = pneg %p97
        %p550 = pneg %p94
        %s551 = sand.u32 %s114, 1
        %s552 = sand.u32 %s114, 1
        %s553 = smul.addr %s552, 128
        %s554 = scalar_lea.vmem [#allocation7], %s553
        %p555 = pneg %p127
        %p556 = pneg %p124
        %s557 = sld [smem:[#allocation4 + %s38]]
        %s558 = smul.u32 16, %s39
        %p559 = scmp.lt.s32.totalorder %s557, 3
        %s560 = scalar_select %p559, %s557, 3
        %p561 = scmp.lt.s32.totalorder %s558, 31
        %s562 = scalar_select %p561, %s558, 31
        %s563 = smul.addr %s560, 32
        %s564 = sadd.s32 %s562, %s563
        %s565 = smul.addr %s564, 8
        %s566 = scalar_lea.vmem %s5, %s565
        %p567 = pneg %p157
        %p568 = pneg %p154
        %p569 = pneg %p183
        %p570 = pneg %p180
        %p571 = scmp.lt.s32.totalorder %s38, 7
        %s572 = scalar_select %p571, %s38, 7
        %s573 = smul.addr %s572, 8
        %s574 = scalar_lea.vmem %s6, %s573
        %p575 = pneg %p211
        %p576 = pneg %p208
        %p577 = scmp.lt.s32.totalorder %s38, 7
        %s578 = scalar_select %p577, %s38, 7
        %p579 = scmp.lt.s32.totalorder %s39, 1
        %s580 = scalar_select %p579, %s39, 1
        %s581 = smul.addr %s578, 2
        %s582 = sadd.s32 %s580, %s581
        %s583 = smul.addr %s582, 8
        %s584 = scalar_lea.vmem %s7, %s583
        %p585 = pneg %p239
        %p586 = pneg %p236
        %p587 = scmp.lt.s32.totalorder %s38, 7
        %s588 = scalar_select %p587, %s38, 7
        %p589 = scmp.lt.s32.totalorder %s39, 1
        %s590 = scalar_select %p589, %s39, 1
        %s591 = smul.addr %s588, 2
        %s592 = sadd.s32 %s590, %s591
        %s593 = smul.addr %s592, 8
        %s594 = scalar_lea.vmem %s8, %s593
        %p595 = pneg %p267
        %p596 = pneg %p264
        %p597 = scmp.lt.s32.totalorder %s38, 7
        %s598 = scalar_select %p597, %s38, 7
        %p599 = scmp.lt.s32.totalorder %s39, 1
        %s600 = scalar_select %p599, %s39, 1
        %s601 = smul.addr %s598, 2
        %s602 = sadd.s32 %s600, %s601
        %s603 = smul.addr %s602, 8
        %s604 = scalar_lea.vmem %s9, %s603
        %p605 = scmp.lt.s32.totalorder %s38, 7
        %s606 = scalar_select %p605, %s38, 7
        %s607 = smul.addr %s606, 8
        %s608 = scalar_lea.vmem %s2, %s607
        %s609 = sld [smem:[#allocation4 + %s38]]
        %s610 = sld [smem:[#allocation4 + %s38]]
        %s611 = sld [smem:[#allocation4 + %s38]]
        %s612 = smul.u32 16, %s39
        %p613 = scmp.lt.s32.totalorder %s611, 3
        %s614 = scalar_select %p613, %s611, 3
        %p615 = scmp.lt.s32.totalorder %s612, 31
        %s616 = scalar_select %p615, %s612, 31
        %s617 = smul.addr %s614, 32
        %s618 = sadd.s32 %s616, %s617
        %s619 = smul.addr %s618, 8
        %s620 = scalar_lea.vmem %s5, %s619
        %s621 = sld [smem:[#allocation4 + %s38]]
        %s622 = smul.u32 16, %s39
        %p623 = scmp.lt.s32.totalorder %s38, 7
        %s624 = scalar_select %p623, %s38, 7
        %s625 = smul.addr %s624, 8
        %s626 = scalar_lea.vmem %s6, %s625
        %p627 = scmp.lt.s32.totalorder %s38, 7
        %s628 = scalar_select %p627, %s38, 7
        %p629 = scmp.lt.s32.totalorder %s39, 1
        %s630 = scalar_select %p629, %s39, 1
        %s631 = smul.addr %s628, 2
        %s632 = sadd.s32 %s630, %s631
        %s633 = smul.addr %s632, 8
        %s634 = scalar_lea.vmem %s7, %s633
        %p635 = scmp.lt.s32.totalorder %s38, 7
        %s636 = scalar_select %p635, %s38, 7
        %p637 = scmp.lt.s32.totalorder %s39, 1
        %s638 = scalar_select %p637, %s39, 1
        %s639 = smul.addr %s636, 2
        %s640 = sadd.s32 %s638, %s639
        %s641 = smul.addr %s640, 8
        %s642 = scalar_lea.vmem %s8, %s641
        %p643 = scmp.lt.s32.totalorder %s38, 7
        %s644 = scalar_select %p643, %s38, 7
        %p645 = scmp.lt.s32.totalorder %s39, 1
        %s646 = scalar_select %p645, %s39, 1
        %s647 = smul.addr %s644, 2
        %s648 = sadd.s32 %s646, %s647
        %s649 = smul.addr %s648, 8
        %s650 = scalar_lea.vmem %s9, %s649
        %s651 = sld [smem:[#allocation5 + %s38]]
        %p652 = scmp.ne.s32.totalorder %s651, 0
        // Predicated region
        $region113: #{qwen3_moe_grouped_gemm_forward.4} parent=103 // pred_check
          %p653 = pneg %p652
        $region114: #{qwen3_moe_grouped_gemm_forward.4} parent=103 // pred_check_branch
          %655 = sbr.rel (%p653) target = $region116
        $region115: #{qwen3_moe_grouped_gemm_forward.4} parent=103 // pred_region
          %p656 = scmp.eq.s32.totalorder %s39, 0
          // Predicated region
          $region117: #{qwen3_moe_grouped_gemm_forward.4} parent=115 // pred_check
            %p657 = pneg %p656
          $region118: #{qwen3_moe_grouped_gemm_forward.4} parent=115 // pred_check_branch
            %659 = sbr.rel (%p657) target = $region120
          $region119: #{qwen3_moe_grouped_gemm_forward.4} parent=115 // pred_region
            %660 = vst [vmem:[#allocation2] sm:$0xff] 0.0
          $region120: #{qwen3_moe_grouped_gemm_forward.4} parent=115 // pred_fallthru
            _
          %v661 = vld [vmem:[%s608] sm:$0xff]
          %v662 = vld [vmem:[%s528] sm:$0xff]
          %v663 = vld [vmem:[%s528 + $0x8] sm:$0xff]
          %v664 = vld [vmem:[%s528 + $0x10] sm:$0xff]
          %v665 = vld [vmem:[%s528 + $0x18] sm:$0xff]
          %v666 = vld [vmem:[%s528 + $0x20] sm:$0xff]
          %v667 = vld [vmem:[%s528 + $0x28] sm:$0xff]
          %v668 = vld [vmem:[%s528 + $0x30] sm:$0xff]
          %v669 = vld [vmem:[%s528 + $0x38] sm:$0xff]
          %v670 = vld [vmem:[%s528 + $0x40] sm:$0xff]
          %v671 = vld [vmem:[%s528 + $0x48] sm:$0xff]
          %v672 = vld [vmem:[%s528 + $0x50] sm:$0xff]
          %v673 = vld [vmem:[%s528 + $0x58] sm:$0xff]
          %v674 = vld [vmem:[%s528 + $0x60] sm:$0xff]
          %v675 = vld [vmem:[%s528 + $0x68] sm:$0xff]
          %v676 = vld [vmem:[%s528 + $0x70] sm:$0xff]
          %v677 = vld [vmem:[%s528 + $0x78] sm:$0xff]
          %678 = vmatpush.msra.mxu0 %v677
          %679 = vmatpush.msra.mxu0 %v676
          %680 = vmatpush.msra.mxu0 %v675
          %681 = vmatpush.msra.mxu0 %v674
          %682 = vmatpush.msra.mxu0 %v673
          %683 = vmatpush.msra.mxu0 %v672
          %684 = vmatpush.msra.mxu0 %v671
          %685 = vmatpush.msra.mxu0 %v670
          %686 = vmatpush.msra.mxu0 %v669
          %687 = vmatpush.msra.mxu0 %v668
          %688 = vmatpush.msra.mxu0 %v667
          %689 = vmatpush.msra.mxu0 %v666
          %690 = vmatpush.msra.mxu0 %v665
          %691 = vmatpush.msra.mxu0 %v664
          %692 = vmatpush.msra.mxu0 %v663
          %693 = vmatpush.msra.mxu0 %v662
          %694 = vmatmul.f32.gmra.mxu0 %v661
          %v695 = vpop.f32.mrf.mxu0
          %v696 = vadd.f32 0.0, %v695
          %697 = vdwg.mxu0
          %v698 = vld [vmem:[%s535] sm:$0xff]
          %v699 = vld [vmem:[%s535 + $0x8] sm:$0xff]
          %v700 = vld [vmem:[%s535 + $0x10] sm:$0xff]
          %v701 = vld [vmem:[%s535 + $0x18] sm:$0xff]
          %v702 = vld [vmem:[%s535 + $0x20] sm:$0xff]
          %v703 = vld [vmem:[%s535 + $0x28] sm:$0xff]
          %v704 = vld [vmem:[%s535 + $0x30] sm:$0xff]
          %v705 = vld [vmem:[%s535 + $0x38] sm:$0xff]
          %v706 = vld [vmem:[%s535 + $0x40] sm:$0xff]
          %v707 = vld [vmem:[%s535 + $0x48] sm:$0xff]
          %v708 = vld [vmem:[%s535 + $0x50] sm:$0xff]
          %v709 = vld [vmem:[%s535 + $0x58] sm:$0xff]
          %v710 = vld [vmem:[%s535 + $0x60] sm:$0xff]
          %v711 = vld [vmem:[%s535 + $0x68] sm:$0xff]
          %v712 = vld [vmem:[%s535 + $0x70] sm:$0xff]
          %v713 = vld [vmem:[%s535 + $0x78] sm:$0xff]
          %714 = vmatpush.msra.mxu0 %v713
          %715 = vmatpush.msra.mxu0 %v712
          %716 = vmatpush.msra.mxu0 %v711
          %717 = vmatpush.msra.mxu0 %v710
          %718 = vmatpush.msra.mxu0 %v709
          %719 = vmatpush.msra.mxu0 %v708
          %720 = vmatpush.msra.mxu0 %v707
          %721 = vmatpush.msra.mxu0 %v706
          %722 = vmatpush.msra.mxu0 %v705
          %723 = vmatpush.msra.mxu0 %v704
          %724 = vmatpush.msra.mxu0 %v703
          %725 = vmatpush.msra.mxu0 %v702
          %726 = vmatpush.msra.mxu0 %v701
          %727 = vmatpush.msra.mxu0 %v700
          %728 = vmatpush.msra.mxu0 %v699
          %729 = vmatpush.msra.mxu0 %v698
          %730 = vmatmul.f32.gmra.mxu0 %v661
          %v731 = vpop.f32.mrf.mxu0
          %v732 = vadd.f32 0.0, %v731
          %733 = vdwg.mxu0
          %v734 = vxor.u32 %v696, 2147483648
          %v735 = vmul.f32 %v734, 1.442695
          %v736 = vpow.pop %v735
          %v737 = vadd.f32 %v736, 1.0
          %v738 = vrcp.pop %v737
          %v739 = vmul.f32 %v737, %v738
          %v740 = vsub.f32 1.0, %v739
          %v741 = vmul.f32 %v738, %v740
          %v742 = vadd.f32 %v738, %v741
          %vm743 = vweird.f32 %v737
          %vm744 = vweird.f32 %v738
          %vm745 = vmor %vm743, %vm744
          %v746 = vsel %vm745, %v738, %v742
          %v747 = vand.u32 2147483647, %v737
          %vm748 = vcmp.eq.f32.partialorder %v747, 8.507059e+37
          %v749 = vand.u32 %v737, 2147483648
          %v750 = vor.u32 1.1754944e-38, %v749
          %v751 = vsel %vm748, %v750, %v746
          %v752 = vmul.f32 1.0, %v751
          %v753 = vmul.f32 %v696, %v752
          %v754 = vmul.f32 %v753, %v732
          %v755 = vld [vmem:[#allocation2] sm:$0xff]
          %v756 = vld [vmem:[%s620] sm:$0xff]
          %v757 = vld [vmem:[%s620 + $0x8] sm:$0xff]
          %v758 = vld [vmem:[%s620 + $0x10] sm:$0xff]
          %v759 = vld [vmem:[%s620 + $0x18] sm:$0xff]
          %v760 = vld [vmem:[%s620 + $0x20] sm:$0xff]
          %v761 = vld [vmem:[%s620 + $0x28] sm:$0xff]
          %v762 = vld [vmem:[%s620 + $0x30] sm:$0xff]
          %v763 = vld [vmem:[%s620 + $0x38] sm:$0xff]
          %v764 = vld [vmem:[%s620 + $0x40] sm:$0xff]
          %v765 = vld [vmem:[%s620 + $0x48] sm:$0xff]
          %v766 = vld [vmem:[%s620 + $0x50] sm:$0xff]
          %v767 = vld [vmem:[%s620 + $0x58] sm:$0xff]
          %v768 = vld [vmem:[%s620 + $0x60] sm:$0xff]
          %v769 = vld [vmem:[%s620 + $0x68] sm:$0xff]
          %v770 = vld [vmem:[%s620 + $0x70] sm:$0xff]
          %v771 = vld [vmem:[%s620 + $0x78] sm:$0xff]
          %772 = vmatpush.msra.mxu0 %v771
          %773 = vmatpush.msra.mxu0 %v770
          %774 = vmatpush.msra.mxu0 %v769
          %775 = vmatpush.msra.mxu0 %v768
          %776 = vmatpush.msra.mxu0 %v767
          %777 = vmatpush.msra.mxu0 %v766
          %778 = vmatpush.msra.mxu0 %v765
          %779 = vmatpush.msra.mxu0 %v764
          %780 = vmatpush.msra.mxu0 %v763
          %781 = vmatpush.msra.mxu0 %v762
          %782 = vmatpush.msra.mxu0 %v761
          %783 = vmatpush.msra.mxu0 %v760
          %784 = vmatpush.msra.mxu0 %v759
          %785 = vmatpush.msra.mxu0 %v758
          %786 = vmatpush.msra.mxu0 %v757
          %787 = vmatpush.msra.mxu0 %v756
          %788 = vmatmul.f32.gmra.mxu0 %v754
          %v789 = vpop.f32.mrf.mxu0
          %v790 = vadd.f32 0.0, %v789
          %791 = vdwg.mxu0
          %v792 = vadd.f32 %v755, %v790
          %793 = vst [vmem:[#allocation2] sm:$0xff] %v792
          %794 = vst [vmem:[%s634] sm:$0xff] %v696
          %795 = vst [vmem:[%s642] sm:$0xff] %v732
          %796 = vst [vmem:[%s650] sm:$0xff] %v754
          %p797 = scmp.eq.s32.totalorder %s39, 1
          // Predicated region
          $region121: #{qwen3_moe_grouped_gemm_forward.4} parent=115 // pred_check
            %p798 = pneg %p797
          $region122: #{qwen3_moe_grouped_gemm_forward.4} parent=115 // pred_check_branch
            %800 = sbr.rel (%p798) target = $region124
          $region123: #{qwen3_moe_grouped_gemm_forward.4} parent=115 // pred_region
            %v801 = vld [vmem:[#allocation2] sm:$0xff]
            %802 = vst [vmem:[%s626] sm:$0xff] %v801
          $region124: #{qwen3_moe_grouped_gemm_forward.4} parent=115 // pred_fallthru
            _
        $region116: #{qwen3_moe_grouped_gemm_forward.4} parent=103 // pred_fallthru
          _
        %p803 = scmp.lt.s32.totalorder %s38, 7
        %s804 = scalar_select %p803, %s38, 7
        %s805 = smul.addr %s804, 8
        %s806 = scalar_lea.vmem %s6, %s805
        %p807 = scmp.lt.s32.totalorder %s38, 7
        %s808 = scalar_select %p807, %s38, 7
        %p809 = scmp.lt.s32.totalorder %s39, 1
        %s810 = scalar_select %p809, %s39, 1
        %s811 = smul.addr %s808, 2
        %s812 = sadd.s32 %s810, %s811
        %s813 = smul.addr %s812, 8
        %s814 = scalar_lea.vmem %s7, %s813
        %p815 = scmp.lt.s32.totalorder %s38, 7
        %s816 = scalar_select %p815, %s38, 7
        %p817 = scmp.lt.s32.totalorder %s39, 1
        %s818 = scalar_select %p817, %s39, 1
        %s819 = smul.addr %s816, 2
        %s820 = sadd.s32 %s818, %s819
        %s821 = smul.addr %s820, 8
        %s822 = scalar_lea.vmem %s8, %s821
        %p823 = scmp.lt.s32.totalorder %s38, 7
        %s824 = scalar_select %p823, %s38, 7
        %p825 = scmp.lt.s32.totalorder %s39, 1
        %s826 = scalar_select %p825, %s39, 1
        %s827 = smul.addr %s824, 2
        %s828 = sadd.s32 %s826, %s827
        %s829 = smul.addr %s828, 8
        %s830 = scalar_lea.vmem %s9, %s829
        // Predicated region
        $region125: #{qwen3_moe_grouped_gemm_forward.4} parent=103 // pred_check
          %p831 = pneg %p180
        $region126: #{qwen3_moe_grouped_gemm_forward.4} parent=103 // pred_check_branch
          %833 = sbr.rel (%p831) target = $region128
        $region127: #{qwen3_moe_grouped_gemm_forward.4} parent=103 // pred_region
          _
        $region128: #{qwen3_moe_grouped_gemm_forward.4} parent=103 // pred_fallthru
          _
        // Predicated region
        $region129: #{qwen3_moe_grouped_gemm_forward.4} parent=103 // pred_check
          %p834 = pneg %p208
        $region130: #{qwen3_moe_grouped_gemm_forward.4} parent=103 // pred_check_branch
          %836 = sbr.rel (%p834) target = $region132
        $region131: #{qwen3_moe_grouped_gemm_forward.4} parent=103 // pred_region
          _
        $region132: #{qwen3_moe_grouped_gemm_forward.4} parent=103 // pred_fallthru
          _
        // Predicated region
        $region133: #{qwen3_moe_grouped_gemm_forward.4} parent=103 // pred_check
          %p837 = pneg %p236
        $region134: #{qwen3_moe_grouped_gemm_forward.4} parent=103 // pred_check_branch
          %839 = sbr.rel (%p837) target = $region136
        $region135: #{qwen3_moe_grouped_gemm_forward.4} parent=103 // pred_region
          _
        $region136: #{qwen3_moe_grouped_gemm_forward.4} parent=103 // pred_fallthru
          _
        // Predicated region
        $region137: #{qwen3_moe_grouped_gemm_forward.4} parent=103 // pred_check
          %p840 = pneg %p264
        $region138: #{qwen3_moe_grouped_gemm_forward.4} parent=103 // pred_check_branch
          %842 = sbr.rel (%p840) target = $region140
        $region139: #{qwen3_moe_grouped_gemm_forward.4} parent=103 // pred_region
          _
        $region140: #{qwen3_moe_grouped_gemm_forward.4} parent=103 // pred_fallthru
          _
      $region104: #{qwen3_moe_grouped_gemm_forward.4} parent=5 // pred_fallthru
        _
      %p843 = scmp.le.s32.totalorder 2, %s29
      // Predicated region
      $region141: #{qwen3_moe_grouped_gemm_forward.4} parent=5 // pred_check
        %p844 = pneg %p843
      $region142: #{qwen3_moe_grouped_gemm_forward.4} parent=5 // pred_check_branch
        %846 = sbr.rel (%p844) target = $region144
      $region143: #{qwen3_moe_grouped_gemm_forward.4} parent=5 // pred_region
        %s847 = ssub.s32 %s29, 2
        // Predicated region
        $region145: #{qwen3_moe_grouped_gemm_forward.4} parent=143 // pred_check
          %p848 = pneg %p186
        $region146: #{qwen3_moe_grouped_gemm_forward.4} parent=143 // pred_check_branch
          %850 = sbr.rel (%p848) target = $region148
        $region147: #{qwen3_moe_grouped_gemm_forward.4} parent=143 // pred_region
          %p851 = scmp.lt.s32.totalorder %s40, 7
          %s852 = scalar_select %p851, %s40, 7
          %s853 = smul.addr %s852, 8
          %s854 = scalar_lea.vmem %s6, %s853
        $region148: #{qwen3_moe_grouped_gemm_forward.4} parent=143 // pred_fallthru
          _
        // Predicated region
        $region149: #{qwen3_moe_grouped_gemm_forward.4} parent=143 // pred_check
          %p855 = pneg %p214
        $region150: #{qwen3_moe_grouped_gemm_forward.4} parent=143 // pred_check_branch
          %857 = sbr.rel (%p855) target = $region152
        $region151: #{qwen3_moe_grouped_gemm_forward.4} parent=143 // pred_region
          %p858 = scmp.lt.s32.totalorder %s40, 7
          %s859 = scalar_select %p858, %s40, 7
          %p860 = scmp.lt.s32.totalorder %s41, 1
          %s861 = scalar_select %p860, %s41, 1
          %s862 = smul.addr %s859, 2
          %s863 = sadd.s32 %s861, %s862
          %s864 = smul.addr %s863, 8
          %s865 = scalar_lea.vmem %s7, %s864
        $region152: #{qwen3_moe_grouped_gemm_forward.4} parent=143 // pred_fallthru
          _
        // Predicated region
        $region153: #{qwen3_moe_grouped_gemm_forward.4} parent=143 // pred_check
          %p866 = pneg %p242
        $region154: #{qwen3_moe_grouped_gemm_forward.4} parent=143 // pred_check_branch
          %868 = sbr.rel (%p866) target = $region156
        $region155: #{qwen3_moe_grouped_gemm_forward.4} parent=143 // pred_region
          %p869 = scmp.lt.s32.totalorder %s40, 7
          %s870 = scalar_select %p869, %s40, 7
          %p871 = scmp.lt.s32.totalorder %s41, 1
          %s872 = scalar_select %p871, %s41, 1
          %s873 = smul.addr %s870, 2
          %s874 = sadd.s32 %s872, %s873
          %s875 = smul.addr %s874, 8
          %s876 = scalar_lea.vmem %s8, %s875
        $region156: #{qwen3_moe_grouped_gemm_forward.4} parent=143 // pred_fallthru
          _
        // Predicated region
        $region157: #{qwen3_moe_grouped_gemm_forward.4} parent=143 // pred_check
          %p877 = pneg %p270
        $region158: #{qwen3_moe_grouped_gemm_forward.4} parent=143 // pred_check_branch
          %879 = sbr.rel (%p877) target = $region160
        $region159: #{qwen3_moe_grouped_gemm_forward.4} parent=143 // pred_region
          %p880 = scmp.lt.s32.totalorder %s40, 7
          %s881 = scalar_select %p880, %s40, 7
          %p882 = scmp.lt.s32.totalorder %s41, 1
          %s883 = scalar_select %p882, %s41, 1
          %s884 = smul.addr %s881, 2
          %s885 = sadd.s32 %s883, %s884
          %s886 = smul.addr %s885, 8
          %s887 = scalar_lea.vmem %s9, %s886
        $region160: #{qwen3_moe_grouped_gemm_forward.4} parent=143 // pred_fallthru
          _
      $region144: #{qwen3_moe_grouped_gemm_forward.4} parent=5 // pred_fallthru
        _
    $region6: #{qwen3_moe_grouped_gemm_forward.4} parent=1 // loop_footer
      %s33 = sadd.s32 1, %s29
    $region7: #{qwen3_moe_grouped_gemm_forward.4} parent=1 // loop_footer_branch
      %28 = sbr.rel target = $region3
    $region8: #{qwen3_moe_grouped_gemm_forward.4} parent=1 // loop_exit
      _

// kernel: qwen3_moe_grouped_gemm_forward.5
$region0: #{qwen3_moe_grouped_gemm_forward.5}
  #allocation0 [shape = 'u32[]', space=smem, size = 0x4, offset = 0x4, fixed_abs, tag = 'smem constant byte address 0x4 - core index']
  #allocation1 [shape = 'u32[72,128]{1,0:T(1,128)}', space=vmem, size = 0x9000, scoped, tag = 'internal scratch']
  %s0 = inlined_call_operand.vmem [shape: f32[2,16,128], index: 0, kind: input, shape index: {}]
  %s1 = inlined_call_operand.vmem [shape: f32[2,16,1], index: 1, kind: input, shape index: {}]
  %s2 = inlined_call_operand.hbm [shape: f32[16,128], index: 2, kind: output, shape index: {}]
  %s3 = sld [smem:[#allocation0]]
  $region18: #{qwen3_moe_grouped_gemm_forward.5} parent=0
    _
  %s5 = ssub.s32 1, %s3
  %s6 = scalar_select 0, %s5, %s3
  $region1: #{qwen3_moe_grouped_gemm_forward.5} parent=0
    #allocation2 [shape = 'u8[8192]{0}', space=vmem, size = 0x2000, scoped, tag = 'output window, operand 0, single buffered']
    #allocation3 [shape = 's32[1]{0}', space=sflag, size = 0x4, scoped, tag = 'scoped memory for qwen3_moe_grouped_gemm_forward.5']
    %7 = vsyncpa [#allocation3], 0
    // Predicated region
    $region2: #{qwen3_moe_grouped_gemm_forward.5} parent=1 // pred_check
      _
    $region3: #{qwen3_moe_grouped_gemm_forward.5} parent=1 // pred_check_branch
      %9 = sbr.rel (0) target = $region5
    $region4: #{qwen3_moe_grouped_gemm_forward.5} parent=1 // pred_region
      _
    $region5: #{qwen3_moe_grouped_gemm_forward.5} parent=1 // pred_fallthru
      _
    // Predicated region
    $region6: #{qwen3_moe_grouped_gemm_forward.5} parent=1 // pred_check
      _
    $region7: #{qwen3_moe_grouped_gemm_forward.5} parent=1 // pred_check_branch
      %11 = sbr.rel (0) target = $region9
    $region8: #{qwen3_moe_grouped_gemm_forward.5} parent=1 // pred_region
      _
    $region9: #{qwen3_moe_grouped_gemm_forward.5} parent=1 // pred_fallthru
      _
    %v12 = vld [vmem:[%s0] sm:$0xff]
    %v13 = vld [vmem:[%s0 + $0x8] sm:$0xff]
    %v14 = vld [vmem:[%s1] sm:$0xff]
    %v15 = vld [vmem:[%s1 + $0x8] sm:$0xff]
    %17 = vset.pattern.permute.xlu0 0
    %18 = vperm.xlu0 %17, %v14
    %v19 = vpop.permute.xlu0 %18
    %22 = vset.pattern.permute.xlu0 0
    %23 = vperm.xlu0 %22, %v15
    %v24 = vpop.permute.xlu0 %23
    %v26 = vmul.f32 %v12, %v19
    %v27 = vmul.f32 %v13, %v24
    %s28 = scalar_lea.vmem %s0, 16
    %v29 = vld [vmem:[%s28] sm:$0xff]
    %v30 = vld [vmem:[%s28 + $0x8] sm:$0xff]
    %s31 = scalar_lea.vmem %s1, 16
    %v32 = vld [vmem:[%s31] sm:$0xff]
    %v33 = vld [vmem:[%s31 + $0x8] sm:$0xff]
    %35 = vset.pattern.permute.xlu0 0
    %36 = vperm.xlu0 %35, %v32
    %v37 = vpop.permute.xlu0 %36
    %40 = vset.pattern.permute.xlu0 0
    %41 = vperm.xlu0 %40, %v33
    %v42 = vpop.permute.xlu0 %41
    %v44 = vmul.f32 %v29, %v37
    %v45 = vmul.f32 %v30, %v42
    %v46 = vadd.f32 %v26, %v44
    %v47 = vadd.f32 %v27, %v45
    %48 = vst [vmem:[#allocation2] sm:$0xff] %v46
    %49 = vst [vmem:[#allocation2 + $0x8] sm:$0xff] %v47
    // Predicated region
    $region10: #{qwen3_moe_grouped_gemm_forward.5} parent=1 // pred_check
      _
    $region11: #{qwen3_moe_grouped_gemm_forward.5} parent=1 // pred_check_branch
      %51 = sbr.rel (0) target = $region13
    $region12: #{qwen3_moe_grouped_gemm_forward.5} parent=1 // pred_region
      %53 = vsyncadd [#allocation3], 0
      %s54 = sshll.u32 [#allocation2], 4
      %s55 = int_to_ptr.vmem [resolvable:$true] %s54
      %s56 = sshll.u32 %s2, 4
      %s57 = int_to_ptr.hbm [resolvable:$true] %s56
      %62 = dma.vmem_to_hbm [thread:$0]  %s55, 256, %s57, [#allocation3], 128, 128, 8
    $region13: #{qwen3_moe_grouped_gemm_forward.5} parent=1 // pred_fallthru
      _
    // Predicated region
    $region14: #{qwen3_moe_grouped_gemm_forward.5} parent=1 // pred_check
      _
    $region15: #{qwen3_moe_grouped_gemm_forward.5} parent=1 // pred_check_branch
      %64 = sbr.rel (0) target = $region17
    $region16: #{qwen3_moe_grouped_gemm_forward.5} parent=1 // pred_region
      %66 = dma.done [#allocation3], 256
    $region17: #{qwen3_moe_grouped_gemm_forward.5} parent=1 // pred_fallthru
      _
    %67 = vsyncpa [#allocation3], 1

</llo_original>
